<compile_context>
chip_gen: v5e
topology: v5e:2x2
jax: 0.10.0
libtpu: 0.0.40
codegen_flags: <defaults>
</compile_context>

<pallas_src>
import jax
import jax.numpy as jnp
import numpy as np
from jax import lax
from jax.experimental import pallas as pl
from jax.experimental.pallas import tpu as pltpu


# ---------------------------------------------------------------------------
# Pallas kernel: wavefront multi-layer LSTM + batched linear head.
# ---------------------------------------------------------------------------
def make_discriminator_kernel(L, Bp, T, I, H):
    def kernel(x_ref, p_ref, head_ref, out_ref):
        # x_ref    : (T*Bp, I)     time-major, batch padded to Bp sublanes
        # p_ref    : (L, 2H+8, 4H) rows 0:D_in = w_ih, H:2H = w_hh, 2H = bias
        # head_ref : (8, H)        row 0 = w_lin^T, row 1 col 0 = b_lin
        # out_ref  : (L*Bp, 1)

        def gate_step(gates, c_prev):
            # two full-width activations instead of four sliced 32-lane calls
            sig = jax.nn.sigmoid(gates)              # (Bp, 4H)
            th = jnp.tanh(gates)                     # (Bp, 4H)
            i_g = sig[:, 0 * H:1 * H]
            f_g = sig[:, 1 * H:2 * H]
            o_g = sig[:, 3 * H:4 * H]
            g_g = th[:, 2 * H:3 * H]
            c = i_g * g_g if c_prev is None else f_g * c_prev + i_g * g_g
            h = o_g * jnp.tanh(c)
            return h, c

        # ---- layer 0: input projection hoisted out of the recurrence -------
        w_ih0 = p_ref[0, 0:I, :]                     # (I, 4H)
        w_hh0 = p_ref[0, H:2 * H, :]                 # (H, 4H)
        bias0 = p_ref[0, 2 * H:2 * H + 1, :]         # (1, 4H)
        pre0 = (jnp.dot(x_ref[...], w_ih0, preferred_element_type=jnp.float32)
                + bias0)                             # (T*Bp, 4H)

        # ---- layers >= 1: fused per-step weights ----------------------------
        w_cat = [p_ref[l, 0:2 * H, :] for l in range(1, L)]        # (2H, 4H)
        w_ih_hi = [p_ref[l, 0:H, :] for l in range(1, L)]          # (H, 4H)
        bias_hi = [p_ref[l, 2 * H:2 * H + 1, :] for l in range(1, L)]

        h_seq = [[None] * T for _ in range(L)]       # h_{l,t}
        c_state = [None] * L                         # running c per layer

        # Wavefront schedule: cell (l, t) on diagonal d = l + t.  Cells on the
        # same diagonal are independent, so the dependent chain is T + L - 1.
        for d in range(T + L - 1):
            for l in range(L):
                t = d - l
                if t < 0 or t >= T:
                    continue
                if l == 0:
                    g = pre0[t * Bp:(t + 1) * Bp]    # aligned (8, 128) slice
                    if t > 0:
                        g = g + jnp.dot(h_seq[0][t - 1], w_hh0,
                                        preferred_element_type=jnp.float32)
                else:
                    x_in = h_seq[l - 1][t]           # (Bp, H)
                    if t == 0:                       # h_{l,-1} == 0
                        g = (jnp.dot(x_in, w_ih_hi[l - 1],
                                     preferred_element_type=jnp.float32)
                             + bias_hi[l - 1])
                    else:
                        xin = jnp.concatenate([x_in, h_seq[l][t - 1]], axis=1)
                        g = (jnp.dot(xin, w_cat[l - 1],
                                     preferred_element_type=jnp.float32)
                             + bias_hi[l - 1])
                h, c = gate_step(g, c_state[l] if t > 0 else None)
                h_seq[l][t] = h
                c_state[l] = c

        # ---- linear heads: VPU multiply + lane reduction (no N=1 matmul) ---
        h_all = jnp.concatenate([h_seq[l][T - 1] for l in range(L)], axis=0)
        w_row = head_ref[0:1, :]                     # (1, H)
        b_val = head_ref[1:2, 0:1]                   # (1, 1)
        out_ref[...] = jnp.sum(h_all * w_row, axis=-1, keepdims=True) + b_val

    return kernel


def discriminator_forward(x_bti, layer_params, w_lin, b_lin):
    """x_bti: (B, T, I) float32.  Returns (B * num_layers, 1, 1)."""
    B, T, I = x_bti.shape
    H = w_lin.shape[0]
    L = len(layer_params)
    Bp = 8                                            # sublane-aligned batch pad
    assert B <= Bp

    # time-major, batch padded: row t*Bp + b = x[b, t, :]
    x_tm = jnp.transpose(x_bti, (1, 0, 2))            # (T, B, I)
    x_tm = jnp.pad(x_tm, ((0, 0), (0, Bp - B), (0, 0)))
    x_flat = x_tm.reshape(T * Bp, I)

    # pack all LSTM params into one slab -> 3 input DMAs total
    R = 2 * H + 8
    P = jnp.zeros((L, R, 4 * H), jnp.float32)
    for l, (w_ih, w_hh, bias) in enumerate(layer_params):
        d_in = w_ih.shape[0]
        P = P.at[l, 0:d_in, :].set(w_ih)
        P = P.at[l, H:2 * H, :].set(w_hh)
        P = P.at[l, 2 * H, :].set(bias[0])

    head = jnp.zeros((8, H), jnp.float32)
    head = head.at[0, :].set(w_lin[:, 0])
    head = head.at[1, 0].set(b_lin[0, 0])

    kernel = make_discriminator_kernel(L, Bp, T, I, H)
    out = pl.pallas_call(
        kernel,
        out_shape=jax.ShapeDtypeStruct((L * Bp, 1), jnp.float32),
        in_specs=[pl.BlockSpec(memory_space=pltpu.MemorySpace.VMEM)] * 3,
        out_specs=pl.BlockSpec(memory_space=pltpu.MemorySpace.VMEM),
    )(x_flat, P, head)

    # kernel row index is l*Bp + b; PyTorch cat order is b*L + l.
    out = out.reshape(L, Bp)[:, :B]                   # (L, B)
    return out.transpose(1, 0).reshape(B * L, 1, 1)


# ---------------------------------------------------------------------------
# Pure-JAX reference (for correctness check)
# ---------------------------------------------------------------------------
def reference_forward(x_bti, layer_params, w_lin, b_lin):
    B, T, I = x_bti.shape
    H = w_lin.shape[0]
    layer_in = x_bti
    outs = []
    for (w_ih, w_hh, bias) in layer_params:
        def step(carry, x_t):
            h, c = carry
            gates = x_t @ w_ih + h @ w_hh + bias
            i_g = jax.nn.sigmoid(gates[:, 0 * H:1 * H])
            f_g = jax.nn.sigmoid(gates[:, 1 * H:2 * H])
            g_g = jnp.tanh(gates[:, 2 * H:3 * H])
            o_g = jax.nn.sigmoid(gates[:, 3 * H:4 * H])
            c = f_g * c + i_g * g_g
            h = o_g * jnp.tanh(c)
            return (h, c), h

        init = (jnp.zeros((B, H), jnp.float32), jnp.zeros((B, H), jnp.float32))
        (h_fin, _), hs = lax.scan(step, init, jnp.swapaxes(layer_in, 0, 1))
        layer_in = jnp.swapaxes(hs, 0, 1)
        outs.append(h_fin @ w_lin + b_lin)            # (B, 1)
    res = jnp.stack(outs, axis=1)                     # (B, L, 1)
    return res.reshape(B * len(layer_params), 1, 1)


# ---------------------------------------------------------------------------
# Main
# ---------------------------------------------------------------------------
if __name__ == "__main__":
    # module hyper-parameters (small, consistent with the forward pass)
    input_size = 16
    hidden_size = 32
    number_of_layers = 2
    dropout_value = 0.0
    batch = 2
    target_length = 8          # seq length used by the PyTorch forward

    B, T, I, H, L = batch, target_length, input_size, hidden_size, number_of_layers

    key = jax.random.PRNGKey(0)
    keys = jax.random.split(key, 4 * L + 4)
    k_it = iter(keys)

    # Deterministic parameter init (uniform(-1/sqrt(H), 1/sqrt(H)) like PyTorch)
    bound = 1.0 / np.sqrt(H)
    layer_params = []
    for l in range(L):
        d_in = I if l == 0 else H
        w_ih = jax.random.uniform(next(k_it), (d_in, 4 * H), jnp.float32, -bound, bound)
        w_hh = jax.random.uniform(next(k_it), (H, 4 * H), jnp.float32, -bound, bound)
        b_ih = jax.random.uniform(next(k_it), (1, 4 * H), jnp.float32, -bound, bound)
        b_hh = jax.random.uniform(next(k_it), (1, 4 * H), jnp.float32, -bound, bound)
        layer_params.append((w_ih, w_hh, b_ih + b_hh))

    lin_bound = 1.0 / np.sqrt(H)
    w_lin = jax.random.uniform(next(k_it), (H, 1), jnp.float32, -lin_bound, lin_bound)
    b_lin = jax.random.uniform(next(k_it), (1, 1), jnp.float32, -lin_bound, lin_bound)

    # input: (batch, seq, input_size), only the first target_length steps used
    x = jax.random.normal(next(k_it), (B, T, I), jnp.float32)

    out = discriminator_forward(x, layer_params, w_lin, b_lin)
    out = jax.block_until_ready(out)

    ref = jax.block_until_ready(reference_forward(x, layer_params, w_lin, b_lin))
    np.testing.assert_allclose(np.asarray(out), np.asarray(ref), rtol=1e-5, atol=1e-5)
    assert out.shape == (B * L, 1, 1)

    print("KERNEL_OK")
</pallas_src>

<mosaic_0001>
module attributes {stable_mosaic.version = 11 : i64} {
  func.func @kernel(%arg0: memref<64x16xf32, #tpu.memory_space<vmem>>, %arg1: memref<2x72x128xf32, #tpu.memory_space<vmem>>, %arg2: memref<8x32xf32, #tpu.memory_space<vmem>>, %arg3: memref<16x1xf32, #tpu.memory_space<vmem>>) attributes {dimension_semantics = [], scalar_prefetch = 0 : i64, scratch_operands = 0 : i64, tpu.core_type = #tpu.core_type<tc>} {
    %c0 = arith.constant 0 : index
    %c0_0 = arith.constant 0 : index
    %c0_1 = arith.constant 0 : index
    %0 = vector.load %arg1[%c0, %c0_0, %c0_1] : memref<2x72x128xf32, #tpu.memory_space<vmem>>, vector<1x16x128xf32>
    %1 = vector.shape_cast %0 : vector<1x16x128xf32> to vector<16x128xf32>
    %c0_2 = arith.constant 0 : index
    %c32 = arith.constant 32 : index
    %c0_3 = arith.constant 0 : index
    %2 = vector.load %arg1[%c0_2, %c32, %c0_3] : memref<2x72x128xf32, #tpu.memory_space<vmem>>, vector<1x32x128xf32>
    %3 = vector.shape_cast %2 : vector<1x32x128xf32> to vector<32x128xf32>
    %c0_4 = arith.constant 0 : index
    %c64 = arith.constant 64 : index
    %c0_5 = arith.constant 0 : index
    %4 = vector.load %arg1[%c0_4, %c64, %c0_5] : memref<2x72x128xf32, #tpu.memory_space<vmem>>, vector<1x1x128xf32>
    %5 = vector.shape_cast %4 : vector<1x1x128xf32> to vector<1x128xf32>
    %c0_6 = arith.constant 0 : index
    %c0_7 = arith.constant 0 : index
    %6 = vector.load %arg0[%c0_6, %c0_7] : memref<64x16xf32, #tpu.memory_space<vmem>>, vector<64x16xf32>
    %cst = arith.constant dense<0.000000e+00> : vector<64x128xf32>
    %7 = tpu.matmul %6, %1, %cst {dimension_numbers = #tpu.dot_dimension_numbers<[1], [0], [0], [1], [0, 0, 1, 1], [], []>} : vector<64x16xf32>, vector<16x128xf32>, vector<64x128xf32> -> vector<64x128xf32>
    %8 = vector.broadcast %5 : vector<1x128xf32> to vector<64x128xf32>
    %9 = arith.addf %7, %8 : vector<64x128xf32>
    %c1 = arith.constant 1 : index
    %c0_8 = arith.constant 0 : index
    %c0_9 = arith.constant 0 : index
    %10 = vector.load %arg1[%c1, %c0_8, %c0_9] : memref<2x72x128xf32, #tpu.memory_space<vmem>>, vector<1x64x128xf32>
    %11 = vector.shape_cast %10 : vector<1x64x128xf32> to vector<64x128xf32>
    %c1_10 = arith.constant 1 : index
    %c0_11 = arith.constant 0 : index
    %c0_12 = arith.constant 0 : index
    %12 = vector.load %arg1[%c1_10, %c0_11, %c0_12] : memref<2x72x128xf32, #tpu.memory_space<vmem>>, vector<1x32x128xf32>
    %13 = vector.shape_cast %12 : vector<1x32x128xf32> to vector<32x128xf32>
    %c1_13 = arith.constant 1 : index
    %c64_14 = arith.constant 64 : index
    %c0_15 = arith.constant 0 : index
    %14 = vector.load %arg1[%c1_13, %c64_14, %c0_15] : memref<2x72x128xf32, #tpu.memory_space<vmem>>, vector<1x1x128xf32>
    %15 = vector.shape_cast %14 : vector<1x1x128xf32> to vector<1x128xf32>
    %16 = vector.extract_strided_slice %9 {offsets = [0, 0], sizes = [8, 128], strides = [1, 1]} : vector<64x128xf32> to vector<8x128xf32>
    %17 = arith.negf %16 : vector<8x128xf32>
    %18 = math.exp %17 : vector<8x128xf32>
    %cst_16 = arith.constant 1.000000e+00 : f32
    %19 = vector.broadcast %cst_16 : f32 to vector<8x128xf32>
    %20 = arith.addf %19, %18 : vector<8x128xf32>
    %21 = arith.divf %19, %20 : vector<8x128xf32>
    %22 = math.tanh %16 : vector<8x128xf32>
    %23 = vector.extract_strided_slice %21 {offsets = [0, 0], sizes = [8, 32], strides = [1, 1]} : vector<8x128xf32> to vector<8x32xf32>
    %24 = vector.extract_strided_slice %21 {offsets = [0, 96], sizes = [8, 32], strides = [1, 1]} : vector<8x128xf32> to vector<8x32xf32>
    %25 = vector.extract_strided_slice %22 {offsets = [0, 64], sizes = [8, 32], strides = [1, 1]} : vector<8x128xf32> to vector<8x32xf32>
    %26 = arith.mulf %23, %25 : vector<8x32xf32>
    %27 = math.tanh %26 : vector<8x32xf32>
    %28 = arith.mulf %24, %27 : vector<8x32xf32>
    %29 = vector.extract_strided_slice %9 {offsets = [8, 0], sizes = [8, 128], strides = [1, 1]} : vector<64x128xf32> to vector<8x128xf32>
    %cst_17 = arith.constant dense<0.000000e+00> : vector<8x128xf32>
    %30 = tpu.matmul %28, %3, %cst_17 {dimension_numbers = #tpu.dot_dimension_numbers<[1], [0], [0], [1], [0, 0, 1, 1], [], []>} : vector<8x32xf32>, vector<32x128xf32>, vector<8x128xf32> -> vector<8x128xf32>
    %31 = arith.addf %29, %30 : vector<8x128xf32>
    %32 = arith.negf %31 : vector<8x128xf32>
    %33 = math.exp %32 : vector<8x128xf32>
    %cst_18 = arith.constant 1.000000e+00 : f32
    %34 = vector.broadcast %cst_18 : f32 to vector<8x128xf32>
    %35 = arith.addf %34, %33 : vector<8x128xf32>
    %36 = arith.divf %34, %35 : vector<8x128xf32>
    %37 = math.tanh %31 : vector<8x128xf32>
    %38 = vector.extract_strided_slice %36 {offsets = [0, 0], sizes = [8, 32], strides = [1, 1]} : vector<8x128xf32> to vector<8x32xf32>
    %39 = vector.extract_strided_slice %36 {offsets = [0, 32], sizes = [8, 32], strides = [1, 1]} : vector<8x128xf32> to vector<8x32xf32>
    %40 = vector.extract_strided_slice %36 {offsets = [0, 96], sizes = [8, 32], strides = [1, 1]} : vector<8x128xf32> to vector<8x32xf32>
    %41 = vector.extract_strided_slice %37 {offsets = [0, 64], sizes = [8, 32], strides = [1, 1]} : vector<8x128xf32> to vector<8x32xf32>
    %42 = arith.mulf %39, %26 : vector<8x32xf32>
    %43 = arith.mulf %38, %41 : vector<8x32xf32>
    %44 = arith.addf %42, %43 : vector<8x32xf32>
    %45 = math.tanh %44 : vector<8x32xf32>
    %46 = arith.mulf %40, %45 : vector<8x32xf32>
    %cst_19 = arith.constant dense<0.000000e+00> : vector<8x128xf32>
    %47 = tpu.matmul %28, %13, %cst_19 {dimension_numbers = #tpu.dot_dimension_numbers<[1], [0], [0], [1], [0, 0, 1, 1], [], []>} : vector<8x32xf32>, vector<32x128xf32>, vector<8x128xf32> -> vector<8x128xf32>
    %48 = vector.broadcast %15 : vector<1x128xf32> to vector<8x128xf32>
    %49 = arith.addf %47, %48 : vector<8x128xf32>
    %50 = arith.negf %49 : vector<8x128xf32>
    %51 = math.exp %50 : vector<8x128xf32>
    %cst_20 = arith.constant 1.000000e+00 : f32
    %52 = vector.broadcast %cst_20 : f32 to vector<8x128xf32>
    %53 = arith.addf %52, %51 : vector<8x128xf32>
    %54 = arith.divf %52, %53 : vector<8x128xf32>
    %55 = math.tanh %49 : vector<8x128xf32>
    %56 = vector.extract_strided_slice %54 {offsets = [0, 0], sizes = [8, 32], strides = [1, 1]} : vector<8x128xf32> to vector<8x32xf32>
    %57 = vector.extract_strided_slice %54 {offsets = [0, 96], sizes = [8, 32], strides = [1, 1]} : vector<8x128xf32> to vector<8x32xf32>
    %58 = vector.extract_strided_slice %55 {offsets = [0, 64], sizes = [8, 32], strides = [1, 1]} : vector<8x128xf32> to vector<8x32xf32>
    %59 = arith.mulf %56, %58 : vector<8x32xf32>
    %60 = math.tanh %59 : vector<8x32xf32>
    %61 = arith.mulf %57, %60 : vector<8x32xf32>
    %62 = vector.extract_strided_slice %9 {offsets = [16, 0], sizes = [8, 128], strides = [1, 1]} : vector<64x128xf32> to vector<8x128xf32>
    %cst_21 = arith.constant dense<0.000000e+00> : vector<8x128xf32>
    %63 = tpu.matmul %46, %3, %cst_21 {dimension_numbers = #tpu.dot_dimension_numbers<[1], [0], [0], [1], [0, 0, 1, 1], [], []>} : vector<8x32xf32>, vector<32x128xf32>, vector<8x128xf32> -> vector<8x128xf32>
    %64 = arith.addf %62, %63 : vector<8x128xf32>
    %65 = arith.negf %64 : vector<8x128xf32>
    %66 = math.exp %65 : vector<8x128xf32>
    %cst_22 = arith.constant 1.000000e+00 : f32
    %67 = vector.broadcast %cst_22 : f32 to vector<8x128xf32>
    %68 = arith.addf %67, %66 : vector<8x128xf32>
    %69 = arith.divf %67, %68 : vector<8x128xf32>
    %70 = math.tanh %64 : vector<8x128xf32>
    %71 = vector.extract_strided_slice %69 {offsets = [0, 0], sizes = [8, 32], strides = [1, 1]} : vector<8x128xf32> to vector<8x32xf32>
    %72 = vector.extract_strided_slice %69 {offsets = [0, 32], sizes = [8, 32], strides = [1, 1]} : vector<8x128xf32> to vector<8x32xf32>
    %73 = vector.extract_strided_slice %69 {offsets = [0, 96], sizes = [8, 32], strides = [1, 1]} : vector<8x128xf32> to vector<8x32xf32>
    %74 = vector.extract_strided_slice %70 {offsets = [0, 64], sizes = [8, 32], strides = [1, 1]} : vector<8x128xf32> to vector<8x32xf32>
    %75 = arith.mulf %72, %44 : vector<8x32xf32>
    %76 = arith.mulf %71, %74 : vector<8x32xf32>
    %77 = arith.addf %75, %76 : vector<8x32xf32>
    %78 = math.tanh %77 : vector<8x32xf32>
    %79 = arith.mulf %73, %78 : vector<8x32xf32>
    %80 = tpu.concatenate %46, %61 in 1 : vector<8x32xf32>, vector<8x32xf32> -> vector<8x64xf32>
    %cst_23 = arith.constant dense<0.000000e+00> : vector<8x128xf32>
    %81 = tpu.matmul %80, %11, %cst_23 {dimension_numbers = #tpu.dot_dimension_numbers<[1], [0], [0], [1], [0, 0, 1, 1], [], []>} : vector<8x64xf32>, vector<64x128xf32>, vector<8x128xf32> -> vector<8x128xf32>
    %82 = vector.broadcast %15 : vector<1x128xf32> to vector<8x128xf32>
    %83 = arith.addf %81, %82 : vector<8x128xf32>
    %84 = arith.negf %83 : vector<8x128xf32>
    %85 = math.exp %84 : vector<8x128xf32>
    %cst_24 = arith.constant 1.000000e+00 : f32
    %86 = vector.broadcast %cst_24 : f32 to vector<8x128xf32>
    %87 = arith.addf %86, %85 : vector<8x128xf32>
    %88 = arith.divf %86, %87 : vector<8x128xf32>
    %89 = math.tanh %83 : vector<8x128xf32>
    %90 = vector.extract_strided_slice %88 {offsets = [0, 0], sizes = [8, 32], strides = [1, 1]} : vector<8x128xf32> to vector<8x32xf32>
    %91 = vector.extract_strided_slice %88 {offsets = [0, 32], sizes = [8, 32], strides = [1, 1]} : vector<8x128xf32> to vector<8x32xf32>
    %92 = vector.extract_strided_slice %88 {offsets = [0, 96], sizes = [8, 32], strides = [1, 1]} : vector<8x128xf32> to vector<8x32xf32>
    %93 = vector.extract_strided_slice %89 {offsets = [0, 64], sizes = [8, 32], strides = [1, 1]} : vector<8x128xf32> to vector<8x32xf32>
    %94 = arith.mulf %91, %59 : vector<8x32xf32>
    %95 = arith.mulf %90, %93 : vector<8x32xf32>
    %96 = arith.addf %94, %95 : vector<8x32xf32>
    %97 = math.tanh %96 : vector<8x32xf32>
    %98 = arith.mulf %92, %97 : vector<8x32xf32>
    %99 = vector.extract_strided_slice %9 {offsets = [24, 0], sizes = [8, 128], strides = [1, 1]} : vector<64x128xf32> to vector<8x128xf32>
    %cst_25 = arith.constant dense<0.000000e+00> : vector<8x128xf32>
    %100 = tpu.matmul %79, %3, %cst_25 {dimension_numbers = #tpu.dot_dimension_numbers<[1], [0], [0], [1], [0, 0, 1, 1], [], []>} : vector<8x32xf32>, vector<32x128xf32>, vector<8x128xf32> -> vector<8x128xf32>
    %101 = arith.addf %99, %100 : vector<8x128xf32>
    %102 = arith.negf %101 : vector<8x128xf32>
    %103 = math.exp %102 : vector<8x128xf32>
    %cst_26 = arith.constant 1.000000e+00 : f32
    %104 = vector.broadcast %cst_26 : f32 to vector<8x128xf32>
    %105 = arith.addf %104, %103 : vector<8x128xf32>
    %106 = arith.divf %104, %105 : vector<8x128xf32>
    %107 = math.tanh %101 : vector<8x128xf32>
    %108 = vector.extract_strided_slice %106 {offsets = [0, 0], sizes = [8, 32], strides = [1, 1]} : vector<8x128xf32> to vector<8x32xf32>
    %109 = vector.extract_strided_slice %106 {offsets = [0, 32], sizes = [8, 32], strides = [1, 1]} : vector<8x128xf32> to vector<8x32xf32>
    %110 = vector.extract_strided_slice %106 {offsets = [0, 96], sizes = [8, 32], strides = [1, 1]} : vector<8x128xf32> to vector<8x32xf32>
    %111 = vector.extract_strided_slice %107 {offsets = [0, 64], sizes = [8, 32], strides = [1, 1]} : vector<8x128xf32> to vector<8x32xf32>
    %112 = arith.mulf %109, %77 : vector<8x32xf32>
    %113 = arith.mulf %108, %111 : vector<8x32xf32>
    %114 = arith.addf %112, %113 : vector<8x32xf32>
    %115 = math.tanh %114 : vector<8x32xf32>
    %116 = arith.mulf %110, %115 : vector<8x32xf32>
    %117 = tpu.concatenate %79, %98 in 1 : vector<8x32xf32>, vector<8x32xf32> -> vector<8x64xf32>
    %cst_27 = arith.constant dense<0.000000e+00> : vector<8x128xf32>
    %118 = tpu.matmul %117, %11, %cst_27 {dimension_numbers = #tpu.dot_dimension_numbers<[1], [0], [0], [1], [0, 0, 1, 1], [], []>} : vector<8x64xf32>, vector<64x128xf32>, vector<8x128xf32> -> vector<8x128xf32>
    %119 = vector.broadcast %15 : vector<1x128xf32> to vector<8x128xf32>
    %120 = arith.addf %118, %119 : vector<8x128xf32>
    %121 = arith.negf %120 : vector<8x128xf32>
    %122 = math.exp %121 : vector<8x128xf32>
    %cst_28 = arith.constant 1.000000e+00 : f32
    %123 = vector.broadcast %cst_28 : f32 to vector<8x128xf32>
    %124 = arith.addf %123, %122 : vector<8x128xf32>
    %125 = arith.divf %123, %124 : vector<8x128xf32>
    %126 = math.tanh %120 : vector<8x128xf32>
    %127 = vector.extract_strided_slice %125 {offsets = [0, 0], sizes = [8, 32], strides = [1, 1]} : vector<8x128xf32> to vector<8x32xf32>
    %128 = vector.extract_strided_slice %125 {offsets = [0, 32], sizes = [8, 32], strides = [1, 1]} : vector<8x128xf32> to vector<8x32xf32>
    %129 = vector.extract_strided_slice %125 {offsets = [0, 96], sizes = [8, 32], strides = [1, 1]} : vector<8x128xf32> to vector<8x32xf32>
    %130 = vector.extract_strided_slice %126 {offsets = [0, 64], sizes = [8, 32], strides = [1, 1]} : vector<8x128xf32> to vector<8x32xf32>
    %131 = arith.mulf %128, %96 : vector<8x32xf32>
    %132 = arith.mulf %127, %130 : vector<8x32xf32>
    %133 = arith.addf %131, %132 : vector<8x32xf32>
    %134 = math.tanh %133 : vector<8x32xf32>
    %135 = arith.mulf %129, %134 : vector<8x32xf32>
    %136 = vector.extract_strided_slice %9 {offsets = [32, 0], sizes = [8, 128], strides = [1, 1]} : vector<64x128xf32> to vector<8x128xf32>
    %cst_29 = arith.constant dense<0.000000e+00> : vector<8x128xf32>
    %137 = tpu.matmul %116, %3, %cst_29 {dimension_numbers = #tpu.dot_dimension_numbers<[1], [0], [0], [1], [0, 0, 1, 1], [], []>} : vector<8x32xf32>, vector<32x128xf32>, vector<8x128xf32> -> vector<8x128xf32>
    %138 = arith.addf %136, %137 : vector<8x128xf32>
    %139 = arith.negf %138 : vector<8x128xf32>
    %140 = math.exp %139 : vector<8x128xf32>
    %cst_30 = arith.constant 1.000000e+00 : f32
    %141 = vector.broadcast %cst_30 : f32 to vector<8x128xf32>
    %142 = arith.addf %141, %140 : vector<8x128xf32>
    %143 = arith.divf %141, %142 : vector<8x128xf32>
    %144 = math.tanh %138 : vector<8x128xf32>
    %145 = vector.extract_strided_slice %143 {offsets = [0, 0], sizes = [8, 32], strides = [1, 1]} : vector<8x128xf32> to vector<8x32xf32>
    %146 = vector.extract_strided_slice %143 {offsets = [0, 32], sizes = [8, 32], strides = [1, 1]} : vector<8x128xf32> to vector<8x32xf32>
    %147 = vector.extract_strided_slice %143 {offsets = [0, 96], sizes = [8, 32], strides = [1, 1]} : vector<8x128xf32> to vector<8x32xf32>
    %148 = vector.extract_strided_slice %144 {offsets = [0, 64], sizes = [8, 32], strides = [1, 1]} : vector<8x128xf32> to vector<8x32xf32>
    %149 = arith.mulf %146, %114 : vector<8x32xf32>
    %150 = arith.mulf %145, %148 : vector<8x32xf32>
    %151 = arith.addf %149, %150 : vector<8x32xf32>
    %152 = math.tanh %151 : vector<8x32xf32>
    %153 = arith.mulf %147, %152 : vector<8x32xf32>
    %154 = tpu.concatenate %116, %135 in 1 : vector<8x32xf32>, vector<8x32xf32> -> vector<8x64xf32>
    %cst_31 = arith.constant dense<0.000000e+00> : vector<8x128xf32>
    %155 = tpu.matmul %154, %11, %cst_31 {dimension_numbers = #tpu.dot_dimension_numbers<[1], [0], [0], [1], [0, 0, 1, 1], [], []>} : vector<8x64xf32>, vector<64x128xf32>, vector<8x128xf32> -> vector<8x128xf32>
    %156 = vector.broadcast %15 : vector<1x128xf32> to vector<8x128xf32>
    %157 = arith.addf %155, %156 : vector<8x128xf32>
    %158 = arith.negf %157 : vector<8x128xf32>
    %159 = math.exp %158 : vector<8x128xf32>
    %cst_32 = arith.constant 1.000000e+00 : f32
    %160 = vector.broadcast %cst_32 : f32 to vector<8x128xf32>
    %161 = arith.addf %160, %159 : vector<8x128xf32>
    %162 = arith.divf %160, %161 : vector<8x128xf32>
    %163 = math.tanh %157 : vector<8x128xf32>
    %164 = vector.extract_strided_slice %162 {offsets = [0, 0], sizes = [8, 32], strides = [1, 1]} : vector<8x128xf32> to vector<8x32xf32>
    %165 = vector.extract_strided_slice %162 {offsets = [0, 32], sizes = [8, 32], strides = [1, 1]} : vector<8x128xf32> to vector<8x32xf32>
    %166 = vector.extract_strided_slice %162 {offsets = [0, 96], sizes = [8, 32], strides = [1, 1]} : vector<8x128xf32> to vector<8x32xf32>
    %167 = vector.extract_strided_slice %163 {offsets = [0, 64], sizes = [8, 32], strides = [1, 1]} : vector<8x128xf32> to vector<8x32xf32>
    %168 = arith.mulf %165, %133 : vector<8x32xf32>
    %169 = arith.mulf %164, %167 : vector<8x32xf32>
    %170 = arith.addf %168, %169 : vector<8x32xf32>
    %171 = math.tanh %170 : vector<8x32xf32>
    %172 = arith.mulf %166, %171 : vector<8x32xf32>
    %173 = vector.extract_strided_slice %9 {offsets = [40, 0], sizes = [8, 128], strides = [1, 1]} : vector<64x128xf32> to vector<8x128xf32>
    %cst_33 = arith.constant dense<0.000000e+00> : vector<8x128xf32>
    %174 = tpu.matmul %153, %3, %cst_33 {dimension_numbers = #tpu.dot_dimension_numbers<[1], [0], [0], [1], [0, 0, 1, 1], [], []>} : vector<8x32xf32>, vector<32x128xf32>, vector<8x128xf32> -> vector<8x128xf32>
    %175 = arith.addf %173, %174 : vector<8x128xf32>
    %176 = arith.negf %175 : vector<8x128xf32>
    %177 = math.exp %176 : vector<8x128xf32>
    %cst_34 = arith.constant 1.000000e+00 : f32
    %178 = vector.broadcast %cst_34 : f32 to vector<8x128xf32>
    %179 = arith.addf %178, %177 : vector<8x128xf32>
    %180 = arith.divf %178, %179 : vector<8x128xf32>
    %181 = math.tanh %175 : vector<8x128xf32>
    %182 = vector.extract_strided_slice %180 {offsets = [0, 0], sizes = [8, 32], strides = [1, 1]} : vector<8x128xf32> to vector<8x32xf32>
    %183 = vector.extract_strided_slice %180 {offsets = [0, 32], sizes = [8, 32], strides = [1, 1]} : vector<8x128xf32> to vector<8x32xf32>
    %184 = vector.extract_strided_slice %180 {offsets = [0, 96], sizes = [8, 32], strides = [1, 1]} : vector<8x128xf32> to vector<8x32xf32>
    %185 = vector.extract_strided_slice %181 {offsets = [0, 64], sizes = [8, 32], strides = [1, 1]} : vector<8x128xf32> to vector<8x32xf32>
    %186 = arith.mulf %183, %151 : vector<8x32xf32>
    %187 = arith.mulf %182, %185 : vector<8x32xf32>
    %188 = arith.addf %186, %187 : vector<8x32xf32>
    %189 = math.tanh %188 : vector<8x32xf32>
    %190 = arith.mulf %184, %189 : vector<8x32xf32>
    %191 = tpu.concatenate %153, %172 in 1 : vector<8x32xf32>, vector<8x32xf32> -> vector<8x64xf32>
    %cst_35 = arith.constant dense<0.000000e+00> : vector<8x128xf32>
    %192 = tpu.matmul %191, %11, %cst_35 {dimension_numbers = #tpu.dot_dimension_numbers<[1], [0], [0], [1], [0, 0, 1, 1], [], []>} : vector<8x64xf32>, vector<64x128xf32>, vector<8x128xf32> -> vector<8x128xf32>
    %193 = vector.broadcast %15 : vector<1x128xf32> to vector<8x128xf32>
    %194 = arith.addf %192, %193 : vector<8x128xf32>
    %195 = arith.negf %194 : vector<8x128xf32>
    %196 = math.exp %195 : vector<8x128xf32>
    %cst_36 = arith.constant 1.000000e+00 : f32
    %197 = vector.broadcast %cst_36 : f32 to vector<8x128xf32>
    %198 = arith.addf %197, %196 : vector<8x128xf32>
    %199 = arith.divf %197, %198 : vector<8x128xf32>
    %200 = math.tanh %194 : vector<8x128xf32>
    %201 = vector.extract_strided_slice %199 {offsets = [0, 0], sizes = [8, 32], strides = [1, 1]} : vector<8x128xf32> to vector<8x32xf32>
    %202 = vector.extract_strided_slice %199 {offsets = [0, 32], sizes = [8, 32], strides = [1, 1]} : vector<8x128xf32> to vector<8x32xf32>
    %203 = vector.extract_strided_slice %199 {offsets = [0, 96], sizes = [8, 32], strides = [1, 1]} : vector<8x128xf32> to vector<8x32xf32>
    %204 = vector.extract_strided_slice %200 {offsets = [0, 64], sizes = [8, 32], strides = [1, 1]} : vector<8x128xf32> to vector<8x32xf32>
    %205 = arith.mulf %202, %170 : vector<8x32xf32>
    %206 = arith.mulf %201, %204 : vector<8x32xf32>
    %207 = arith.addf %205, %206 : vector<8x32xf32>
    %208 = math.tanh %207 : vector<8x32xf32>
    %209 = arith.mulf %203, %208 : vector<8x32xf32>
    %210 = vector.extract_strided_slice %9 {offsets = [48, 0], sizes = [8, 128], strides = [1, 1]} : vector<64x128xf32> to vector<8x128xf32>
    %cst_37 = arith.constant dense<0.000000e+00> : vector<8x128xf32>
    %211 = tpu.matmul %190, %3, %cst_37 {dimension_numbers = #tpu.dot_dimension_numbers<[1], [0], [0], [1], [0, 0, 1, 1], [], []>} : vector<8x32xf32>, vector<32x128xf32>, vector<8x128xf32> -> vector<8x128xf32>
    %212 = arith.addf %210, %211 : vector<8x128xf32>
    %213 = arith.negf %212 : vector<8x128xf32>
    %214 = math.exp %213 : vector<8x128xf32>
    %cst_38 = arith.constant 1.000000e+00 : f32
    %215 = vector.broadcast %cst_38 : f32 to vector<8x128xf32>
    %216 = arith.addf %215, %214 : vector<8x128xf32>
    %217 = arith.divf %215, %216 : vector<8x128xf32>
    %218 = math.tanh %212 : vector<8x128xf32>
    %219 = vector.extract_strided_slice %217 {offsets = [0, 0], sizes = [8, 32], strides = [1, 1]} : vector<8x128xf32> to vector<8x32xf32>
    %220 = vector.extract_strided_slice %217 {offsets = [0, 32], sizes = [8, 32], strides = [1, 1]} : vector<8x128xf32> to vector<8x32xf32>
    %221 = vector.extract_strided_slice %217 {offsets = [0, 96], sizes = [8, 32], strides = [1, 1]} : vector<8x128xf32> to vector<8x32xf32>
    %222 = vector.extract_strided_slice %218 {offsets = [0, 64], sizes = [8, 32], strides = [1, 1]} : vector<8x128xf32> to vector<8x32xf32>
    %223 = arith.mulf %220, %188 : vector<8x32xf32>
    %224 = arith.mulf %219, %222 : vector<8x32xf32>
    %225 = arith.addf %223, %224 : vector<8x32xf32>
    %226 = math.tanh %225 : vector<8x32xf32>
    %227 = arith.mulf %221, %226 : vector<8x32xf32>
    %228 = tpu.concatenate %190, %209 in 1 : vector<8x32xf32>, vector<8x32xf32> -> vector<8x64xf32>
    %cst_39 = arith.constant dense<0.000000e+00> : vector<8x128xf32>
    %229 = tpu.matmul %228, %11, %cst_39 {dimension_numbers = #tpu.dot_dimension_numbers<[1], [0], [0], [1], [0, 0, 1, 1], [], []>} : vector<8x64xf32>, vector<64x128xf32>, vector<8x128xf32> -> vector<8x128xf32>
    %230 = vector.broadcast %15 : vector<1x128xf32> to vector<8x128xf32>
    %231 = arith.addf %229, %230 : vector<8x128xf32>
    %232 = arith.negf %231 : vector<8x128xf32>
    %233 = math.exp %232 : vector<8x128xf32>
    %cst_40 = arith.constant 1.000000e+00 : f32
    %234 = vector.broadcast %cst_40 : f32 to vector<8x128xf32>
    %235 = arith.addf %234, %233 : vector<8x128xf32>
    %236 = arith.divf %234, %235 : vector<8x128xf32>
    %237 = math.tanh %231 : vector<8x128xf32>
    %238 = vector.extract_strided_slice %236 {offsets = [0, 0], sizes = [8, 32], strides = [1, 1]} : vector<8x128xf32> to vector<8x32xf32>
    %239 = vector.extract_strided_slice %236 {offsets = [0, 32], sizes = [8, 32], strides = [1, 1]} : vector<8x128xf32> to vector<8x32xf32>
    %240 = vector.extract_strided_slice %236 {offsets = [0, 96], sizes = [8, 32], strides = [1, 1]} : vector<8x128xf32> to vector<8x32xf32>
    %241 = vector.extract_strided_slice %237 {offsets = [0, 64], sizes = [8, 32], strides = [1, 1]} : vector<8x128xf32> to vector<8x32xf32>
    %242 = arith.mulf %239, %207 : vector<8x32xf32>
    %243 = arith.mulf %238, %241 : vector<8x32xf32>
    %244 = arith.addf %242, %243 : vector<8x32xf32>
    %245 = math.tanh %244 : vector<8x32xf32>
    %246 = arith.mulf %240, %245 : vector<8x32xf32>
    %247 = vector.extract_strided_slice %9 {offsets = [56, 0], sizes = [8, 128], strides = [1, 1]} : vector<64x128xf32> to vector<8x128xf32>
    %cst_41 = arith.constant dense<0.000000e+00> : vector<8x128xf32>
    %248 = tpu.matmul %227, %3, %cst_41 {dimension_numbers = #tpu.dot_dimension_numbers<[1], [0], [0], [1], [0, 0, 1, 1], [], []>} : vector<8x32xf32>, vector<32x128xf32>, vector<8x128xf32> -> vector<8x128xf32>
    %249 = arith.addf %247, %248 : vector<8x128xf32>
    %250 = arith.negf %249 : vector<8x128xf32>
    %251 = math.exp %250 : vector<8x128xf32>
    %cst_42 = arith.constant 1.000000e+00 : f32
    %252 = vector.broadcast %cst_42 : f32 to vector<8x128xf32>
    %253 = arith.addf %252, %251 : vector<8x128xf32>
    %254 = arith.divf %252, %253 : vector<8x128xf32>
    %255 = math.tanh %249 : vector<8x128xf32>
    %256 = vector.extract_strided_slice %254 {offsets = [0, 0], sizes = [8, 32], strides = [1, 1]} : vector<8x128xf32> to vector<8x32xf32>
    %257 = vector.extract_strided_slice %254 {offsets = [0, 32], sizes = [8, 32], strides = [1, 1]} : vector<8x128xf32> to vector<8x32xf32>
    %258 = vector.extract_strided_slice %254 {offsets = [0, 96], sizes = [8, 32], strides = [1, 1]} : vector<8x128xf32> to vector<8x32xf32>
    %259 = vector.extract_strided_slice %255 {offsets = [0, 64], sizes = [8, 32], strides = [1, 1]} : vector<8x128xf32> to vector<8x32xf32>
    %260 = arith.mulf %257, %225 : vector<8x32xf32>
    %261 = arith.mulf %256, %259 : vector<8x32xf32>
    %262 = arith.addf %260, %261 : vector<8x32xf32>
    %263 = math.tanh %262 : vector<8x32xf32>
    %264 = arith.mulf %258, %263 : vector<8x32xf32>
    %265 = tpu.concatenate %227, %246 in 1 : vector<8x32xf32>, vector<8x32xf32> -> vector<8x64xf32>
    %cst_43 = arith.constant dense<0.000000e+00> : vector<8x128xf32>
    %266 = tpu.matmul %265, %11, %cst_43 {dimension_numbers = #tpu.dot_dimension_numbers<[1], [0], [0], [1], [0, 0, 1, 1], [], []>} : vector<8x64xf32>, vector<64x128xf32>, vector<8x128xf32> -> vector<8x128xf32>
    %267 = vector.broadcast %15 : vector<1x128xf32> to vector<8x128xf32>
    %268 = arith.addf %266, %267 : vector<8x128xf32>
    %269 = arith.negf %268 : vector<8x128xf32>
    %270 = math.exp %269 : vector<8x128xf32>
    %cst_44 = arith.constant 1.000000e+00 : f32
    %271 = vector.broadcast %cst_44 : f32 to vector<8x128xf32>
    %272 = arith.addf %271, %270 : vector<8x128xf32>
    %273 = arith.divf %271, %272 : vector<8x128xf32>
    %274 = math.tanh %268 : vector<8x128xf32>
    %275 = vector.extract_strided_slice %273 {offsets = [0, 0], sizes = [8, 32], strides = [1, 1]} : vector<8x128xf32> to vector<8x32xf32>
    %276 = vector.extract_strided_slice %273 {offsets = [0, 32], sizes = [8, 32], strides = [1, 1]} : vector<8x128xf32> to vector<8x32xf32>
    %277 = vector.extract_strided_slice %273 {offsets = [0, 96], sizes = [8, 32], strides = [1, 1]} : vector<8x128xf32> to vector<8x32xf32>
    %278 = vector.extract_strided_slice %274 {offsets = [0, 64], sizes = [8, 32], strides = [1, 1]} : vector<8x128xf32> to vector<8x32xf32>
    %279 = arith.mulf %276, %244 : vector<8x32xf32>
    %280 = arith.mulf %275, %278 : vector<8x32xf32>
    %281 = arith.addf %279, %280 : vector<8x32xf32>
    %282 = math.tanh %281 : vector<8x32xf32>
    %283 = arith.mulf %277, %282 : vector<8x32xf32>
    %284 = tpu.concatenate %264, %283 in 1 : vector<8x32xf32>, vector<8x32xf32> -> vector<8x64xf32>
    %cst_45 = arith.constant dense<0.000000e+00> : vector<8x128xf32>
    %285 = tpu.matmul %284, %11, %cst_45 {dimension_numbers = #tpu.dot_dimension_numbers<[1], [0], [0], [1], [0, 0, 1, 1], [], []>} : vector<8x64xf32>, vector<64x128xf32>, vector<8x128xf32> -> vector<8x128xf32>
    %286 = vector.broadcast %15 : vector<1x128xf32> to vector<8x128xf32>
    %287 = arith.addf %285, %286 : vector<8x128xf32>
    %288 = arith.negf %287 : vector<8x128xf32>
    %289 = math.exp %288 : vector<8x128xf32>
    %cst_46 = arith.constant 1.000000e+00 : f32
    %290 = vector.broadcast %cst_46 : f32 to vector<8x128xf32>
    %291 = arith.addf %290, %289 : vector<8x128xf32>
    %292 = arith.divf %290, %291 : vector<8x128xf32>
    %293 = math.tanh %287 : vector<8x128xf32>
    %294 = vector.extract_strided_slice %292 {offsets = [0, 0], sizes = [8, 32], strides = [1, 1]} : vector<8x128xf32> to vector<8x32xf32>
    %295 = vector.extract_strided_slice %292 {offsets = [0, 32], sizes = [8, 32], strides = [1, 1]} : vector<8x128xf32> to vector<8x32xf32>
    %296 = vector.extract_strided_slice %292 {offsets = [0, 96], sizes = [8, 32], strides = [1, 1]} : vector<8x128xf32> to vector<8x32xf32>
    %297 = vector.extract_strided_slice %293 {offsets = [0, 64], sizes = [8, 32], strides = [1, 1]} : vector<8x128xf32> to vector<8x32xf32>
    %298 = arith.mulf %295, %281 : vector<8x32xf32>
    %299 = arith.mulf %294, %297 : vector<8x32xf32>
    %300 = arith.addf %298, %299 : vector<8x32xf32>
    %301 = math.tanh %300 : vector<8x32xf32>
    %302 = arith.mulf %296, %301 : vector<8x32xf32>
    %303 = tpu.concatenate %264, %302 in 0 : vector<8x32xf32>, vector<8x32xf32> -> vector<16x32xf32>
    %c0_47 = arith.constant 0 : index
    %c0_48 = arith.constant 0 : index
    %304 = vector.load %arg2[%c0_47, %c0_48] : memref<8x32xf32, #tpu.memory_space<vmem>>, vector<1x32xf32>
    %c1_49 = arith.constant 1 : index
    %c0_50 = arith.constant 0 : index
    %305 = vector.load %arg2[%c1_49, %c0_50] : memref<8x32xf32, #tpu.memory_space<vmem>>, vector<1x1xf32>
    %306 = vector.broadcast %304 : vector<1x32xf32> to vector<16x32xf32>
    %307 = arith.mulf %303, %306 : vector<16x32xf32>
    %cst_51 = arith.constant dense<0.000000e+00> : vector<16xf32>
    %308 = vector.multi_reduction <add>, %307, %cst_51 [1] : vector<16x32xf32> to vector<16xf32>
    %309 = vector.shape_cast %308 : vector<16xf32> to vector<16x1xf32>
    %310 = vector.broadcast %305 : vector<1x1xf32> to vector<16x1xf32>
    %311 = arith.addf %309, %310 : vector<16x1xf32>
    %c0_52 = arith.constant 0 : index
    %c0_53 = arith.constant 0 : index
    %312 = vector.load %arg3[%c0_52, %c0_53] : memref<16x1xf32, #tpu.memory_space<vmem>>, vector<16x1xf32>
    tpu.vector_store %arg3[%c0_52, %c0_53], %311 {strides = array<i32>} : memref<16x1xf32, #tpu.memory_space<vmem>>, vector<16x1xf32>,
    return
  }
}

</mosaic_0001>

<llo_original>
// kernel: tpu_custom_call.1
$region0: #{tpu_custom_call.1}
  #allocation0 [shape = 'u32[]', space=smem, size = 0x4, offset = 0x4, fixed_abs, tag = 'smem constant byte address 0x4 - core index']
  #allocation1 [shape = 'u32[72,128]{1,0:T(1,128)}', space=vmem, size = 0x9000, scoped, tag = 'internal scratch']
  %s0 = inlined_call_operand.vmem [shape: f32[64,16], index: 0, kind: input, shape index: {}]
  %s1 = inlined_call_operand.hbm [shape: f32[2,72,128], index: 1, kind: input, shape index: {}]
  %s2 = inlined_call_operand.vmem [shape: f32[8,32], index: 2, kind: input, shape index: {}]
  %s3 = inlined_call_operand.vmem [shape: f32[16,1], index: 3, kind: output, shape index: {}]
  %s4 = sld [smem:[#allocation0]]
  $region26: #{tpu_custom_call.1} parent=0
    _
  %s6 = ssub.s32 1, %s4
  %s7 = scalar_select 0, %s6, %s4
  $region1: #{tpu_custom_call.1} parent=0
    #allocation2 [shape = 'u8[73728]{0}', space=vmem, size = 0x12000, scoped, tag = 'input window, operand 1, single buffered']
    #allocation3 [shape = 's32[1]{0}', space=sflag, size = 0x4, scoped, tag = 'scoped memory for tpu_custom_call.1']
    %8 = vsyncpa [#allocation3], 0
    // Predicated region
    $region2: #{tpu_custom_call.1} parent=1 // pred_check
      _
    $region3: #{tpu_custom_call.1} parent=1 // pred_check_branch
      %10 = sbr.rel (0) target = $region5
    $region4: #{tpu_custom_call.1} parent=1 // pred_region
      _
    $region5: #{tpu_custom_call.1} parent=1 // pred_fallthru
      _
    // Predicated region
    $region6: #{tpu_custom_call.1} parent=1 // pred_check
      _
    $region7: #{tpu_custom_call.1} parent=1 // pred_check_branch
      %12 = sbr.rel (0) target = $region9
    $region8: #{tpu_custom_call.1} parent=1 // pred_region
      %14 = vsyncadd [#allocation3], 0
      %s15 = sshll.u32 %s1, 4
      %s16 = int_to_ptr.hbm [resolvable:$true] %s15
      %s17 = sshll.u32 [#allocation2], 4
      %s18 = int_to_ptr.vmem [resolvable:$true] %s17
      %23 = dma.hbm_to_vmem [thread:$0]  %s16, 2304, %s18, [#allocation3], 128, 128, 8
    $region9: #{tpu_custom_call.1} parent=1 // pred_fallthru
      _
    // Predicated region
    $region10: #{tpu_custom_call.1} parent=1 // pred_check
      _
    $region11: #{tpu_custom_call.1} parent=1 // pred_check_branch
      %25 = sbr.rel (0) target = $region13
    $region12: #{tpu_custom_call.1} parent=1 // pred_region
      _
    $region13: #{tpu_custom_call.1} parent=1 // pred_fallthru
      _
    // Predicated region
    $region14: #{tpu_custom_call.1} parent=1 // pred_check
      _
    $region15: #{tpu_custom_call.1} parent=1 // pred_check_branch
      %27 = sbr.rel (0) target = $region17
    $region16: #{tpu_custom_call.1} parent=1 // pred_region
      %29 = dma.done [#allocation3], 2304
    $region17: #{tpu_custom_call.1} parent=1 // pred_fallthru
      _
    %v30 = vld [vmem:[#allocation2] sm:$0xff]
    %v31 = vld [vmem:[#allocation2 + $0x8] sm:$0xff]
    %v32 = vld [vmem:[#allocation2 + $0x20] sm:$0xff]
    %v33 = vld [vmem:[#allocation2 + $0x28] sm:$0xff]
    %v34 = vld [vmem:[#allocation2 + $0x30] sm:$0xff]
    %v35 = vld [vmem:[#allocation2 + $0x38] sm:$0xff]
    %v36 = vld [vmem:[#allocation2 + $0x40] sm:$0x1]
    %v37 = vld [vmem:[%s0] sm:$0xff]
    %v38 = vld [vmem:[%s0 + $0x8] sm:$0xff]
    %v39 = vld [vmem:[%s0 + $0x10] sm:$0xff]
    %v40 = vld [vmem:[%s0 + $0x18] sm:$0xff]
    %v41 = vld [vmem:[%s0 + $0x20] sm:$0xff]
    %v42 = vld [vmem:[%s0 + $0x28] sm:$0xff]
    %v43 = vld [vmem:[%s0 + $0x30] sm:$0xff]
    %v44 = vld [vmem:[%s0 + $0x38] sm:$0xff]
    %v45 = vperm.slane %v36, 0
    %vm46 = vcmask 130048
    %v48 = vsel %vm46, %v37, 0
    %v51 = vsel %vm46, %v38, 0
    %v54 = vsel %vm46, %v39, 0
    %v57 = vsel %vm46, %v40, 0
    %v60 = vsel %vm46, %v41, 0
    %v63 = vsel %vm46, %v42, 0
    %v66 = vsel %vm46, %v43, 0
    %v69 = vsel %vm46, %v44, 0
    %71 = vmatpush.msra.mxu0 0.0
    %72 = vmatpush.msra.mxu0 0.0
    %73 = vmatpush.msra.mxu0 0.0
    %74 = vmatpush.msra.mxu0 0.0
    %75 = vmatpush.msra.mxu0 0.0
    %76 = vmatpush.msra.mxu0 0.0
    %77 = vmatpush.msra.mxu0 0.0
    %78 = vmatpush.msra.mxu0 0.0
    %79 = vmatpush.msra.mxu0 0.0
    %80 = vmatpush.msra.mxu0 0.0
    %81 = vmatpush.msra.mxu0 0.0
    %82 = vmatpush.msra.mxu0 0.0
    %83 = vmatpush.msra.mxu0 0.0
    %84 = vmatpush.msra.mxu0 0.0
    %85 = vmatpush.msra.mxu0 %v31
    %86 = vmatpush.msra.mxu0 %v30
    %87 = vmatmul.f32.gmra.mxu0 %v48
    %v88 = vpop.f32.mrf.mxu0
    %v89 = vadd.f32 %v45, %v88
    %90 = vmatmul.f32.gmra.mxu0 %v51
    %v91 = vpop.f32.mrf.mxu0
    %v92 = vadd.f32 %v45, %v91
    %93 = vmatmul.f32.gmra.mxu0 %v54
    %v94 = vpop.f32.mrf.mxu0
    %v95 = vadd.f32 %v45, %v94
    %96 = vmatmul.f32.gmra.mxu0 %v57
    %v97 = vpop.f32.mrf.mxu0
    %v98 = vadd.f32 %v45, %v97
    %99 = vmatmul.f32.gmra.mxu0 %v60
    %v100 = vpop.f32.mrf.mxu0
    %v101 = vadd.f32 %v45, %v100
    %102 = vmatmul.f32.gmra.mxu0 %v63
    %v103 = vpop.f32.mrf.mxu0
    %v104 = vadd.f32 %v45, %v103
    %105 = vmatmul.f32.gmra.mxu0 %v66
    %v106 = vpop.f32.mrf.mxu0
    %v107 = vadd.f32 %v45, %v106
    %108 = vmatmul.f32.gmra.mxu0 %v69
    %v109 = vpop.f32.mrf.mxu0
    %v110 = vadd.f32 %v45, %v109
    %111 = vdwg.mxu0
    %s112 = scalar_lea.vmem [#allocation2], 72
    %v113 = vld [vmem:[%s112] sm:$0xff]
    %v114 = vld [vmem:[%s112 + $0x8] sm:$0xff]
    %v115 = vld [vmem:[%s112 + $0x10] sm:$0xff]
    %v116 = vld [vmem:[%s112 + $0x18] sm:$0xff]
    %v117 = vld [vmem:[%s112 + $0x20] sm:$0xff]
    %v118 = vld [vmem:[%s112 + $0x28] sm:$0xff]
    %v119 = vld [vmem:[%s112 + $0x30] sm:$0xff]
    %v120 = vld [vmem:[%s112 + $0x38] sm:$0xff]
    %v121 = vld [vmem:[%s112 + $0x40] sm:$0x1]
    %v122 = vxor.u32 %v89, 2147483648
    %v123 = vmul.f32 %v122, 1.442695
    %v124 = vpow.pop %v123
    %v125 = vadd.f32 %v124, 1.0
    %v126 = vrcp.pop %v125
    %v127 = vmul.f32 %v125, %v126
    %v128 = vsub.f32 1.0, %v127
    %v129 = vmul.f32 %v126, %v128
    %v130 = vadd.f32 %v126, %v129
    %vm131 = vweird.f32 %v125
    %vm132 = vweird.f32 %v126
    %vm133 = vmor %vm131, %vm132
    %v134 = vsel %vm133, %v126, %v130
    %v135 = vand.u32 2147483647, %v125
    %vm136 = vcmp.eq.f32.partialorder %v135, 8.507059e+37
    %v137 = vand.u32 %v125, 2147483648
    %v138 = vor.u32 1.1754944e-38, %v137
    %v139 = vsel %vm136, %v138, %v134
    %v140 = vmul.f32 1.0, %v139
    %v141 = vtanh.pop %v89
    %143 = vrot.lane.b32.xlu0 %v141, 64
    %v144 = vpop.permute.xlu0 %143
    %v146 = vmul.f32 %v140, %v144
    %v147 = vtanh.pop %v146
    %149 = vrot.lane.b32.xlu0 %v147, 96
    %v150 = vpop.permute.xlu0 %149
    %v152 = vmul.f32 %v140, %v150
    %154 = vrot.lane.b32.xlu0 %v152, 32
    %v155 = vpop.permute.xlu0 %154
    %vm156 = vcmask 261120
    %v157 = vsel %vm156, %v155, 0
    %159 = vmatpush.msra.mxu0 0.0
    %160 = vmatpush.msra.mxu0 0.0
    %161 = vmatpush.msra.mxu0 0.0
    %162 = vmatpush.msra.mxu0 0.0
    %163 = vmatpush.msra.mxu0 0.0
    %164 = vmatpush.msra.mxu0 0.0
    %165 = vmatpush.msra.mxu0 0.0
    %166 = vmatpush.msra.mxu0 0.0
    %167 = vmatpush.msra.mxu0 0.0
    %168 = vmatpush.msra.mxu0 0.0
    %169 = vmatpush.msra.mxu0 0.0
    %170 = vmatpush.msra.mxu0 0.0
    %171 = vmatpush.msra.mxu0 %v35
    %172 = vmatpush.msra.mxu0 %v34
    %173 = vmatpush.msra.mxu0 %v33
    %174 = vmatpush.msra.mxu0 %v32
    %175 = vmatmul.f32.gmra.mxu0 %v157
    %v176 = vpop.f32.mrf.mxu0
    %v177 = vadd.f32 0.0, %v176
    %178 = vdwg.mxu0
    %v179 = vadd.f32 %v92, %v177
    %v180 = vxor.u32 %v179, 2147483648
    %v181 = vmul.f32 %v180, 1.442695
    %v182 = vpow.pop %v181
    %v183 = vadd.f32 %v182, 1.0
    %v184 = vrcp.pop %v183
    %v185 = vmul.f32 %v183, %v184
    %v186 = vsub.f32 1.0, %v185
    %v187 = vmul.f32 %v184, %v186
    %v188 = vadd.f32 %v184, %v187
    %vm189 = vweird.f32 %v183
    %vm190 = vweird.f32 %v184
    %vm191 = vmor %vm189, %vm190
    %v192 = vsel %vm191, %v184, %v188
    %v193 = vand.u32 2147483647, %v183
    %vm194 = vcmp.eq.f32.partialorder %v193, 8.507059e+37
    %v195 = vand.u32 %v183, 2147483648
    %v196 = vor.u32 1.1754944e-38, %v195
    %v197 = vsel %vm194, %v196, %v192
    %v198 = vmul.f32 1.0, %v197
    %v199 = vtanh.pop %v179
    %201 = vrot.lane.b32.xlu0 %v146, 32
    %v202 = vpop.permute.xlu0 %201
    %v204 = vmul.f32 %v198, %v202
    %206 = vrot.lane.b32.xlu0 %v199, 64
    %v207 = vpop.permute.xlu0 %206
    %v209 = vmul.f32 %v198, %v207
    %211 = vrot.lane.b32.xlu0 %v209, 32
    %v212 = vpop.permute.xlu0 %211
    %v214 = vadd.f32 %v204, %v212
    %v215 = vtanh.pop %v214
    %217 = vrot.lane.b32.xlu0 %v215, 64
    %v218 = vpop.permute.xlu0 %217
    %v220 = vmul.f32 %v198, %v218
    %v221 = vperm.slane %v121, 0
    %222 = vmatpush.msra.mxu0 0.0
    %223 = vmatpush.msra.mxu0 0.0
    %224 = vmatpush.msra.mxu0 0.0
    %225 = vmatpush.msra.mxu0 0.0
    %226 = vmatpush.msra.mxu0 0.0
    %227 = vmatpush.msra.mxu0 0.0
    %228 = vmatpush.msra.mxu0 0.0
    %229 = vmatpush.msra.mxu0 0.0
    %230 = vmatpush.msra.mxu0 0.0
    %231 = vmatpush.msra.mxu0 0.0
    %232 = vmatpush.msra.mxu0 0.0
    %233 = vmatpush.msra.mxu0 0.0
    %234 = vmatpush.msra.mxu0 %v116
    %235 = vmatpush.msra.mxu0 %v115
    %236 = vmatpush.msra.mxu0 %v114
    %237 = vmatpush.msra.mxu0 %v113
    %238 = vmatmul.f32.gmra.mxu0 %v157
    %v239 = vpop.f32.mrf.mxu0
    %v240 = vadd.f32 %v221, %v239
    %241 = vdwg.mxu0
    %v242 = vxor.u32 %v240, 2147483648
    %v243 = vmul.f32 %v242, 1.442695
    %v244 = vpow.pop %v243
    %v245 = vadd.f32 %v244, 1.0
    %v246 = vrcp.pop %v245
    %v247 = vmul.f32 %v245, %v246
    %v248 = vsub.f32 1.0, %v247
    %v249 = vmul.f32 %v246, %v248
    %v250 = vadd.f32 %v246, %v249
    %vm251 = vweird.f32 %v245
    %vm252 = vweird.f32 %v246
    %vm253 = vmor %vm251, %vm252
    %v254 = vsel %vm253, %v246, %v250
    %v255 = vand.u32 2147483647, %v245
    %vm256 = vcmp.eq.f32.partialorder %v255, 8.507059e+37
    %v257 = vand.u32 %v245, 2147483648
    %v258 = vor.u32 1.1754944e-38, %v257
    %v259 = vsel %vm256, %v258, %v254
    %v260 = vmul.f32 1.0, %v259
    %v261 = vtanh.pop %v240
    %263 = vrot.lane.b32.xlu0 %v261, 64
    %v264 = vpop.permute.xlu0 %263
    %v266 = vmul.f32 %v260, %v264
    %v267 = vtanh.pop %v266
    %269 = vrot.lane.b32.xlu0 %v267, 96
    %v270 = vpop.permute.xlu0 %269
    %v272 = vmul.f32 %v260, %v270
    %274 = vrot.lane.b32.xlu0 %v220, 32
    %v275 = vpop.permute.xlu0 %274
    %v276 = vsel %vm156, %v275, 0
    %278 = vmatpush.msra.mxu0 0.0
    %279 = vmatpush.msra.mxu0 0.0
    %280 = vmatpush.msra.mxu0 0.0
    %281 = vmatpush.msra.mxu0 0.0
    %282 = vmatpush.msra.mxu0 0.0
    %283 = vmatpush.msra.mxu0 0.0
    %284 = vmatpush.msra.mxu0 0.0
    %285 = vmatpush.msra.mxu0 0.0
    %286 = vmatpush.msra.mxu0 0.0
    %287 = vmatpush.msra.mxu0 0.0
    %288 = vmatpush.msra.mxu0 0.0
    %289 = vmatpush.msra.mxu0 0.0
    %290 = vmatpush.msra.mxu0 %v35
    %291 = vmatpush.msra.mxu0 %v34
    %292 = vmatpush.msra.mxu0 %v33
    %293 = vmatpush.msra.mxu0 %v32
    %294 = vmatmul.f32.gmra.mxu0 %v276
    %v295 = vpop.f32.mrf.mxu0
    %v296 = vadd.f32 0.0, %v295
    %297 = vdwg.mxu0
    %v298 = vadd.f32 %v95, %v296
    %v299 = vxor.u32 %v298, 2147483648
    %v300 = vmul.f32 %v299, 1.442695
    %v301 = vpow.pop %v300
    %v302 = vadd.f32 %v301, 1.0
    %v303 = vrcp.pop %v302
    %v304 = vmul.f32 %v302, %v303
    %v305 = vsub.f32 1.0, %v304
    %v306 = vmul.f32 %v303, %v305
    %v307 = vadd.f32 %v303, %v306
    %vm308 = vweird.f32 %v302
    %vm309 = vweird.f32 %v303
    %vm310 = vmor %vm308, %vm309
    %v311 = vsel %vm310, %v303, %v307
    %v312 = vand.u32 2147483647, %v302
    %vm313 = vcmp.eq.f32.partialorder %v312, 8.507059e+37
    %v314 = vand.u32 %v302, 2147483648
    %v315 = vor.u32 1.1754944e-38, %v314
    %v316 = vsel %vm313, %v315, %v311
    %v317 = vmul.f32 1.0, %v316
    %v318 = vtanh.pop %v298
    %v319 = vmul.f32 %v317, %v214
    %321 = vrot.lane.b32.xlu0 %v318, 64
    %v322 = vpop.permute.xlu0 %321
    %v324 = vmul.f32 %v317, %v322
    %326 = vrot.lane.b32.xlu0 %v324, 32
    %v327 = vpop.permute.xlu0 %326
    %v329 = vadd.f32 %v319, %v327
    %v330 = vtanh.pop %v329
    %332 = vrot.lane.b32.xlu0 %v330, 64
    %v333 = vpop.permute.xlu0 %332
    %v335 = vmul.f32 %v317, %v333
    %338 = vrot.lane.b32.xlu0 %v272, 64
    %v339 = vpop.permute.xlu0 %338
    %v341 = vsel %vm156, %v275, %v339
    %vm342 = vcmask 523264
    %v344 = vsel %vm342, %v341, 0
    %346 = vmatpush.msra.mxu0 0.0
    %347 = vmatpush.msra.mxu0 0.0
    %348 = vmatpush.msra.mxu0 0.0
    %349 = vmatpush.msra.mxu0 0.0
    %350 = vmatpush.msra.mxu0 0.0
    %351 = vmatpush.msra.mxu0 0.0
    %352 = vmatpush.msra.mxu0 0.0
    %353 = vmatpush.msra.mxu0 0.0
    %354 = vmatpush.msra.mxu0 %v120
    %355 = vmatpush.msra.mxu0 %v119
    %356 = vmatpush.msra.mxu0 %v118
    %357 = vmatpush.msra.mxu0 %v117
    %358 = vmatpush.msra.mxu0 %v116
    %359 = vmatpush.msra.mxu0 %v115
    %360 = vmatpush.msra.mxu0 %v114
    %361 = vmatpush.msra.mxu0 %v113
    %362 = vmatmul.f32.gmra.mxu0 %v344
    %v363 = vpop.f32.mrf.mxu0
    %v364 = vadd.f32 %v221, %v363
    %365 = vdwg.mxu0
    %v366 = vxor.u32 %v364, 2147483648
    %v367 = vmul.f32 %v366, 1.442695
    %v368 = vpow.pop %v367
    %v369 = vadd.f32 %v368, 1.0
    %v370 = vrcp.pop %v369
    %v371 = vmul.f32 %v369, %v370
    %v372 = vsub.f32 1.0, %v371
    %v373 = vmul.f32 %v370, %v372
    %v374 = vadd.f32 %v370, %v373
    %vm375 = vweird.f32 %v369
    %vm376 = vweird.f32 %v370
    %vm377 = vmor %vm375, %vm376
    %v378 = vsel %vm377, %v370, %v374
    %v379 = vand.u32 2147483647, %v369
    %vm380 = vcmp.eq.f32.partialorder %v379, 8.507059e+37
    %v381 = vand.u32 %v369, 2147483648
    %v382 = vor.u32 1.1754944e-38, %v381
    %v383 = vsel %vm380, %v382, %v378
    %v384 = vmul.f32 1.0, %v383
    %v385 = vtanh.pop %v364
    %387 = vrot.lane.b32.xlu0 %v266, 32
    %v388 = vpop.permute.xlu0 %387
    %v390 = vmul.f32 %v384, %v388
    %392 = vrot.lane.b32.xlu0 %v385, 64
    %v393 = vpop.permute.xlu0 %392
    %v395 = vmul.f32 %v384, %v393
    %397 = vrot.lane.b32.xlu0 %v395, 32
    %v398 = vpop.permute.xlu0 %397
    %v400 = vadd.f32 %v390, %v398
    %v401 = vtanh.pop %v400
    %403 = vrot.lane.b32.xlu0 %v401, 64
    %v404 = vpop.permute.xlu0 %403
    %v406 = vmul.f32 %v384, %v404
    %408 = vrot.lane.b32.xlu0 %v335, 32
    %v409 = vpop.permute.xlu0 %408
    %v410 = vsel %vm156, %v409, 0
    %412 = vmatpush.msra.mxu0 0.0
    %413 = vmatpush.msra.mxu0 0.0
    %414 = vmatpush.msra.mxu0 0.0
    %415 = vmatpush.msra.mxu0 0.0
    %416 = vmatpush.msra.mxu0 0.0
    %417 = vmatpush.msra.mxu0 0.0
    %418 = vmatpush.msra.mxu0 0.0
    %419 = vmatpush.msra.mxu0 0.0
    %420 = vmatpush.msra.mxu0 0.0
    %421 = vmatpush.msra.mxu0 0.0
    %422 = vmatpush.msra.mxu0 0.0
    %423 = vmatpush.msra.mxu0 0.0
    %424 = vmatpush.msra.mxu0 %v35
    %425 = vmatpush.msra.mxu0 %v34
    %426 = vmatpush.msra.mxu0 %v33
    %427 = vmatpush.msra.mxu0 %v32
    %428 = vmatmul.f32.gmra.mxu0 %v410
    %v429 = vpop.f32.mrf.mxu0
    %v430 = vadd.f32 0.0, %v429
    %431 = vdwg.mxu0
    %v432 = vadd.f32 %v98, %v430
    %v433 = vxor.u32 %v432, 2147483648
    %v434 = vmul.f32 %v433, 1.442695
    %v435 = vpow.pop %v434
    %v436 = vadd.f32 %v435, 1.0
    %v437 = vrcp.pop %v436
    %v438 = vmul.f32 %v436, %v437
    %v439 = vsub.f32 1.0, %v438
    %v440 = vmul.f32 %v437, %v439
    %v441 = vadd.f32 %v437, %v440
    %vm442 = vweird.f32 %v436
    %vm443 = vweird.f32 %v437
    %vm444 = vmor %vm442, %vm443
    %v445 = vsel %vm444, %v437, %v441
    %v446 = vand.u32 2147483647, %v436
    %vm447 = vcmp.eq.f32.partialorder %v446, 8.507059e+37
    %v448 = vand.u32 %v436, 2147483648
    %v449 = vor.u32 1.1754944e-38, %v448
    %v450 = vsel %vm447, %v449, %v445
    %v451 = vmul.f32 1.0, %v450
    %v452 = vtanh.pop %v432
    %v453 = vmul.f32 %v451, %v329
    %455 = vrot.lane.b32.xlu0 %v452, 64
    %v456 = vpop.permute.xlu0 %455
    %v458 = vmul.f32 %v451, %v456
    %460 = vrot.lane.b32.xlu0 %v458, 32
    %v461 = vpop.permute.xlu0 %460
    %v463 = vadd.f32 %v453, %v461
    %v464 = vtanh.pop %v463
    %466 = vrot.lane.b32.xlu0 %v464, 64
    %v467 = vpop.permute.xlu0 %466
    %v469 = vmul.f32 %v451, %v467
    %472 = vrot.lane.b32.xlu0 %v406, 64
    %v473 = vpop.permute.xlu0 %472
    %v475 = vsel %vm156, %v409, %v473
    %v477 = vsel %vm342, %v475, 0
    %479 = vmatpush.msra.mxu0 0.0
    %480 = vmatpush.msra.mxu0 0.0
    %481 = vmatpush.msra.mxu0 0.0
    %482 = vmatpush.msra.mxu0 0.0
    %483 = vmatpush.msra.mxu0 0.0
    %484 = vmatpush.msra.mxu0 0.0
    %485 = vmatpush.msra.mxu0 0.0
    %486 = vmatpush.msra.mxu0 0.0
    %487 = vmatpush.msra.mxu0 %v120
    %488 = vmatpush.msra.mxu0 %v119
    %489 = vmatpush.msra.mxu0 %v118
    %490 = vmatpush.msra.mxu0 %v117
    %491 = vmatpush.msra.mxu0 %v116
    %492 = vmatpush.msra.mxu0 %v115
    %493 = vmatpush.msra.mxu0 %v114
    %494 = vmatpush.msra.mxu0 %v113
    %495 = vmatmul.f32.gmra.mxu0 %v477
    %v496 = vpop.f32.mrf.mxu0
    %v497 = vadd.f32 %v221, %v496
    %498 = vdwg.mxu0
    %v499 = vxor.u32 %v497, 2147483648
    %v500 = vmul.f32 %v499, 1.442695
    %v501 = vpow.pop %v500
    %v502 = vadd.f32 %v501, 1.0
    %v503 = vrcp.pop %v502
    %v504 = vmul.f32 %v502, %v503
    %v505 = vsub.f32 1.0, %v504
    %v506 = vmul.f32 %v503, %v505
    %v507 = vadd.f32 %v503, %v506
    %vm508 = vweird.f32 %v502
    %vm509 = vweird.f32 %v503
    %vm510 = vmor %vm508, %vm509
    %v511 = vsel %vm510, %v503, %v507
    %v512 = vand.u32 2147483647, %v502
    %vm513 = vcmp.eq.f32.partialorder %v512, 8.507059e+37
    %v514 = vand.u32 %v502, 2147483648
    %v515 = vor.u32 1.1754944e-38, %v514
    %v516 = vsel %vm513, %v515, %v511
    %v517 = vmul.f32 1.0, %v516
    %v518 = vtanh.pop %v497
    %v519 = vmul.f32 %v517, %v400
    %521 = vrot.lane.b32.xlu0 %v518, 64
    %v522 = vpop.permute.xlu0 %521
    %v524 = vmul.f32 %v517, %v522
    %526 = vrot.lane.b32.xlu0 %v524, 32
    %v527 = vpop.permute.xlu0 %526
    %v529 = vadd.f32 %v519, %v527
    %v530 = vtanh.pop %v529
    %532 = vrot.lane.b32.xlu0 %v530, 64
    %v533 = vpop.permute.xlu0 %532
    %v535 = vmul.f32 %v517, %v533
    %537 = vrot.lane.b32.xlu0 %v469, 32
    %v538 = vpop.permute.xlu0 %537
    %v539 = vsel %vm156, %v538, 0
    %541 = vmatpush.msra.mxu0 0.0
    %542 = vmatpush.msra.mxu0 0.0
    %543 = vmatpush.msra.mxu0 0.0
    %544 = vmatpush.msra.mxu0 0.0
    %545 = vmatpush.msra.mxu0 0.0
    %546 = vmatpush.msra.mxu0 0.0
    %547 = vmatpush.msra.mxu0 0.0
    %548 = vmatpush.msra.mxu0 0.0
    %549 = vmatpush.msra.mxu0 0.0
    %550 = vmatpush.msra.mxu0 0.0
    %551 = vmatpush.msra.mxu0 0.0
    %552 = vmatpush.msra.mxu0 0.0
    %553 = vmatpush.msra.mxu0 %v35
    %554 = vmatpush.msra.mxu0 %v34
    %555 = vmatpush.msra.mxu0 %v33
    %556 = vmatpush.msra.mxu0 %v32
    %557 = vmatmul.f32.gmra.mxu0 %v539
    %v558 = vpop.f32.mrf.mxu0
    %v559 = vadd.f32 0.0, %v558
    %560 = vdwg.mxu0
    %v561 = vadd.f32 %v101, %v559
    %v562 = vxor.u32 %v561, 2147483648
    %v563 = vmul.f32 %v562, 1.442695
    %v564 = vpow.pop %v563
    %v565 = vadd.f32 %v564, 1.0
    %v566 = vrcp.pop %v565
    %v567 = vmul.f32 %v565, %v566
    %v568 = vsub.f32 1.0, %v567
    %v569 = vmul.f32 %v566, %v568
    %v570 = vadd.f32 %v566, %v569
    %vm571 = vweird.f32 %v565
    %vm572 = vweird.f32 %v566
    %vm573 = vmor %vm571, %vm572
    %v574 = vsel %vm573, %v566, %v570
    %v575 = vand.u32 2147483647, %v565
    %vm576 = vcmp.eq.f32.partialorder %v575, 8.507059e+37
    %v577 = vand.u32 %v565, 2147483648
    %v578 = vor.u32 1.1754944e-38, %v577
    %v579 = vsel %vm576, %v578, %v574
    %v580 = vmul.f32 1.0, %v579
    %v581 = vtanh.pop %v561
    %v582 = vmul.f32 %v580, %v463
    %584 = vrot.lane.b32.xlu0 %v581, 64
    %v585 = vpop.permute.xlu0 %584
    %v587 = vmul.f32 %v580, %v585
    %589 = vrot.lane.b32.xlu0 %v587, 32
    %v590 = vpop.permute.xlu0 %589
    %v592 = vadd.f32 %v582, %v590
    %v593 = vtanh.pop %v592
    %595 = vrot.lane.b32.xlu0 %v593, 64
    %v596 = vpop.permute.xlu0 %595
    %v598 = vmul.f32 %v580, %v596
    %601 = vrot.lane.b32.xlu0 %v535, 64
    %v602 = vpop.permute.xlu0 %601
    %v604 = vsel %vm156, %v538, %v602
    %v606 = vsel %vm342, %v604, 0
    %608 = vmatpush.msra.mxu0 0.0
    %609 = vmatpush.msra.mxu0 0.0
    %610 = vmatpush.msra.mxu0 0.0
    %611 = vmatpush.msra.mxu0 0.0
    %612 = vmatpush.msra.mxu0 0.0
    %613 = vmatpush.msra.mxu0 0.0
    %614 = vmatpush.msra.mxu0 0.0
    %615 = vmatpush.msra.mxu0 0.0
    %616 = vmatpush.msra.mxu0 %v120
    %617 = vmatpush.msra.mxu0 %v119
    %618 = vmatpush.msra.mxu0 %v118
    %619 = vmatpush.msra.mxu0 %v117
    %620 = vmatpush.msra.mxu0 %v116
    %621 = vmatpush.msra.mxu0 %v115
    %622 = vmatpush.msra.mxu0 %v114
    %623 = vmatpush.msra.mxu0 %v113
    %624 = vmatmul.f32.gmra.mxu0 %v606
    %v625 = vpop.f32.mrf.mxu0
    %v626 = vadd.f32 %v221, %v625
    %627 = vdwg.mxu0
    %v628 = vxor.u32 %v626, 2147483648
    %v629 = vmul.f32 %v628, 1.442695
    %v630 = vpow.pop %v629
    %v631 = vadd.f32 %v630, 1.0
    %v632 = vrcp.pop %v631
    %v633 = vmul.f32 %v631, %v632
    %v634 = vsub.f32 1.0, %v633
    %v635 = vmul.f32 %v632, %v634
    %v636 = vadd.f32 %v632, %v635
    %vm637 = vweird.f32 %v631
    %vm638 = vweird.f32 %v632
    %vm639 = vmor %vm637, %vm638
    %v640 = vsel %vm639, %v632, %v636
    %v641 = vand.u32 2147483647, %v631
    %vm642 = vcmp.eq.f32.partialorder %v641, 8.507059e+37
    %v643 = vand.u32 %v631, 2147483648
    %v644 = vor.u32 1.1754944e-38, %v643
    %v645 = vsel %vm642, %v644, %v640
    %v646 = vmul.f32 1.0, %v645
    %v647 = vtanh.pop %v626
    %v648 = vmul.f32 %v646, %v529
    %650 = vrot.lane.b32.xlu0 %v647, 64
    %v651 = vpop.permute.xlu0 %650
    %v653 = vmul.f32 %v646, %v651
    %655 = vrot.lane.b32.xlu0 %v653, 32
    %v656 = vpop.permute.xlu0 %655
    %v658 = vadd.f32 %v648, %v656
    %v659 = vtanh.pop %v658
    %661 = vrot.lane.b32.xlu0 %v659, 64
    %v662 = vpop.permute.xlu0 %661
    %v664 = vmul.f32 %v646, %v662
    %666 = vrot.lane.b32.xlu0 %v598, 32
    %v667 = vpop.permute.xlu0 %666
    %v668 = vsel %vm156, %v667, 0
    %670 = vmatpush.msra.mxu0 0.0
    %671 = vmatpush.msra.mxu0 0.0
    %672 = vmatpush.msra.mxu0 0.0
    %673 = vmatpush.msra.mxu0 0.0
    %674 = vmatpush.msra.mxu0 0.0
    %675 = vmatpush.msra.mxu0 0.0
    %676 = vmatpush.msra.mxu0 0.0
    %677 = vmatpush.msra.mxu0 0.0
    %678 = vmatpush.msra.mxu0 0.0
    %679 = vmatpush.msra.mxu0 0.0
    %680 = vmatpush.msra.mxu0 0.0
    %681 = vmatpush.msra.mxu0 0.0
    %682 = vmatpush.msra.mxu0 %v35
    %683 = vmatpush.msra.mxu0 %v34
    %684 = vmatpush.msra.mxu0 %v33
    %685 = vmatpush.msra.mxu0 %v32
    %686 = vmatmul.f32.gmra.mxu0 %v668
    %v687 = vpop.f32.mrf.mxu0
    %v688 = vadd.f32 0.0, %v687
    %689 = vdwg.mxu0
    %v690 = vadd.f32 %v104, %v688
    %v691 = vxor.u32 %v690, 2147483648
    %v692 = vmul.f32 %v691, 1.442695
    %v693 = vpow.pop %v692
    %v694 = vadd.f32 %v693, 1.0
    %v695 = vrcp.pop %v694
    %v696 = vmul.f32 %v694, %v695
    %v697 = vsub.f32 1.0, %v696
    %v698 = vmul.f32 %v695, %v697
    %v699 = vadd.f32 %v695, %v698
    %vm700 = vweird.f32 %v694
    %vm701 = vweird.f32 %v695
    %vm702 = vmor %vm700, %vm701
    %v703 = vsel %vm702, %v695, %v699
    %v704 = vand.u32 2147483647, %v694
    %vm705 = vcmp.eq.f32.partialorder %v704, 8.507059e+37
    %v706 = vand.u32 %v694, 2147483648
    %v707 = vor.u32 1.1754944e-38, %v706
    %v708 = vsel %vm705, %v707, %v703
    %v709 = vmul.f32 1.0, %v708
    %v710 = vtanh.pop %v690
    %v711 = vmul.f32 %v709, %v592
    %713 = vrot.lane.b32.xlu0 %v710, 64
    %v714 = vpop.permute.xlu0 %713
    %v716 = vmul.f32 %v709, %v714
    %718 = vrot.lane.b32.xlu0 %v716, 32
    %v719 = vpop.permute.xlu0 %718
    %v721 = vadd.f32 %v711, %v719
    %v722 = vtanh.pop %v721
    %724 = vrot.lane.b32.xlu0 %v722, 64
    %v725 = vpop.permute.xlu0 %724
    %v727 = vmul.f32 %v709, %v725
    %730 = vrot.lane.b32.xlu0 %v664, 64
    %v731 = vpop.permute.xlu0 %730
    %v733 = vsel %vm156, %v667, %v731
    %v735 = vsel %vm342, %v733, 0
    %737 = vmatpush.msra.mxu0 0.0
    %738 = vmatpush.msra.mxu0 0.0
    %739 = vmatpush.msra.mxu0 0.0
    %740 = vmatpush.msra.mxu0 0.0
    %741 = vmatpush.msra.mxu0 0.0
    %742 = vmatpush.msra.mxu0 0.0
    %743 = vmatpush.msra.mxu0 0.0
    %744 = vmatpush.msra.mxu0 0.0
    %745 = vmatpush.msra.mxu0 %v120
    %746 = vmatpush.msra.mxu0 %v119
    %747 = vmatpush.msra.mxu0 %v118
    %748 = vmatpush.msra.mxu0 %v117
    %749 = vmatpush.msra.mxu0 %v116
    %750 = vmatpush.msra.mxu0 %v115
    %751 = vmatpush.msra.mxu0 %v114
    %752 = vmatpush.msra.mxu0 %v113
    %753 = vmatmul.f32.gmra.mxu0 %v735
    %v754 = vpop.f32.mrf.mxu0
    %v755 = vadd.f32 %v221, %v754
    %756 = vdwg.mxu0
    %v757 = vxor.u32 %v755, 2147483648
    %v758 = vmul.f32 %v757, 1.442695
    %v759 = vpow.pop %v758
    %v760 = vadd.f32 %v759, 1.0
    %v761 = vrcp.pop %v760
    %v762 = vmul.f32 %v760, %v761
    %v763 = vsub.f32 1.0, %v762
    %v764 = vmul.f32 %v761, %v763
    %v765 = vadd.f32 %v761, %v764
    %vm766 = vweird.f32 %v760
    %vm767 = vweird.f32 %v761
    %vm768 = vmor %vm766, %vm767
    %v769 = vsel %vm768, %v761, %v765
    %v770 = vand.u32 2147483647, %v760
    %vm771 = vcmp.eq.f32.partialorder %v770, 8.507059e+37
    %v772 = vand.u32 %v760, 2147483648
    %v773 = vor.u32 1.1754944e-38, %v772
    %v774 = vsel %vm771, %v773, %v769
    %v775 = vmul.f32 1.0, %v774
    %v776 = vtanh.pop %v755
    %v777 = vmul.f32 %v775, %v658
    %779 = vrot.lane.b32.xlu0 %v776, 64
    %v780 = vpop.permute.xlu0 %779
    %v782 = vmul.f32 %v775, %v780
    %784 = vrot.lane.b32.xlu0 %v782, 32
    %v785 = vpop.permute.xlu0 %784
    %v787 = vadd.f32 %v777, %v785
    %v788 = vtanh.pop %v787
    %790 = vrot.lane.b32.xlu0 %v788, 64
    %v791 = vpop.permute.xlu0 %790
    %v793 = vmul.f32 %v775, %v791
    %795 = vrot.lane.b32.xlu0 %v727, 32
    %v796 = vpop.permute.xlu0 %795
    %v797 = vsel %vm156, %v796, 0
    %799 = vmatpush.msra.mxu0 0.0
    %800 = vmatpush.msra.mxu0 0.0
    %801 = vmatpush.msra.mxu0 0.0
    %802 = vmatpush.msra.mxu0 0.0
    %803 = vmatpush.msra.mxu0 0.0
    %804 = vmatpush.msra.mxu0 0.0
    %805 = vmatpush.msra.mxu0 0.0
    %806 = vmatpush.msra.mxu0 0.0
    %807 = vmatpush.msra.mxu0 0.0
    %808 = vmatpush.msra.mxu0 0.0
    %809 = vmatpush.msra.mxu0 0.0
    %810 = vmatpush.msra.mxu0 0.0
    %811 = vmatpush.msra.mxu0 %v35
    %812 = vmatpush.msra.mxu0 %v34
    %813 = vmatpush.msra.mxu0 %v33
    %814 = vmatpush.msra.mxu0 %v32
    %815 = vmatmul.f32.gmra.mxu0 %v797
    %v816 = vpop.f32.mrf.mxu0
    %v817 = vadd.f32 0.0, %v816
    %818 = vdwg.mxu0
    %v819 = vadd.f32 %v107, %v817
    %v820 = vxor.u32 %v819, 2147483648
    %v821 = vmul.f32 %v820, 1.442695
    %v822 = vpow.pop %v821
    %v823 = vadd.f32 %v822, 1.0
    %v824 = vrcp.pop %v823
    %v825 = vmul.f32 %v823, %v824
    %v826 = vsub.f32 1.0, %v825
    %v827 = vmul.f32 %v824, %v826
    %v828 = vadd.f32 %v824, %v827
    %vm829 = vweird.f32 %v823
    %vm830 = vweird.f32 %v824
    %vm831 = vmor %vm829, %vm830
    %v832 = vsel %vm831, %v824, %v828
    %v833 = vand.u32 2147483647, %v823
    %vm834 = vcmp.eq.f32.partialorder %v833, 8.507059e+37
    %v835 = vand.u32 %v823, 2147483648
    %v836 = vor.u32 1.1754944e-38, %v835
    %v837 = vsel %vm834, %v836, %v832
    %v838 = vmul.f32 1.0, %v837
    %v839 = vtanh.pop %v819
    %v840 = vmul.f32 %v838, %v721
    %842 = vrot.lane.b32.xlu0 %v839, 64
    %v843 = vpop.permute.xlu0 %842
    %v845 = vmul.f32 %v838, %v843
    %847 = vrot.lane.b32.xlu0 %v845, 32
    %v848 = vpop.permute.xlu0 %847
    %v850 = vadd.f32 %v840, %v848
    %v851 = vtanh.pop %v850
    %853 = vrot.lane.b32.xlu0 %v851, 64
    %v854 = vpop.permute.xlu0 %853
    %v856 = vmul.f32 %v838, %v854
    %859 = vrot.lane.b32.xlu0 %v793, 64
    %v860 = vpop.permute.xlu0 %859
    %v862 = vsel %vm156, %v796, %v860
    %v864 = vsel %vm342, %v862, 0
    %866 = vmatpush.msra.mxu0 0.0
    %867 = vmatpush.msra.mxu0 0.0
    %868 = vmatpush.msra.mxu0 0.0
    %869 = vmatpush.msra.mxu0 0.0
    %870 = vmatpush.msra.mxu0 0.0
    %871 = vmatpush.msra.mxu0 0.0
    %872 = vmatpush.msra.mxu0 0.0
    %873 = vmatpush.msra.mxu0 0.0
    %874 = vmatpush.msra.mxu0 %v120
    %875 = vmatpush.msra.mxu0 %v119
    %876 = vmatpush.msra.mxu0 %v118
    %877 = vmatpush.msra.mxu0 %v117
    %878 = vmatpush.msra.mxu0 %v116
    %879 = vmatpush.msra.mxu0 %v115
    %880 = vmatpush.msra.mxu0 %v114
    %881 = vmatpush.msra.mxu0 %v113
    %882 = vmatmul.f32.gmra.mxu0 %v864
    %v883 = vpop.f32.mrf.mxu0
    %v884 = vadd.f32 %v221, %v883
    %885 = vdwg.mxu0
    %v886 = vxor.u32 %v884, 2147483648
    %v887 = vmul.f32 %v886, 1.442695
    %v888 = vpow.pop %v887
    %v889 = vadd.f32 %v888, 1.0
    %v890 = vrcp.pop %v889
    %v891 = vmul.f32 %v889, %v890
    %v892 = vsub.f32 1.0, %v891
    %v893 = vmul.f32 %v890, %v892
    %v894 = vadd.f32 %v890, %v893
    %vm895 = vweird.f32 %v889
    %vm896 = vweird.f32 %v890
    %vm897 = vmor %vm895, %vm896
    %v898 = vsel %vm897, %v890, %v894
    %v899 = vand.u32 2147483647, %v889
    %vm900 = vcmp.eq.f32.partialorder %v899, 8.507059e+37
    %v901 = vand.u32 %v889, 2147483648
    %v902 = vor.u32 1.1754944e-38, %v901
    %v903 = vsel %vm900, %v902, %v898
    %v904 = vmul.f32 1.0, %v903
    %v905 = vtanh.pop %v884
    %v906 = vmul.f32 %v904, %v787
    %908 = vrot.lane.b32.xlu0 %v905, 64
    %v909 = vpop.permute.xlu0 %908
    %v911 = vmul.f32 %v904, %v909
    %913 = vrot.lane.b32.xlu0 %v911, 32
    %v914 = vpop.permute.xlu0 %913
    %v916 = vadd.f32 %v906, %v914
    %v917 = vtanh.pop %v916
    %919 = vrot.lane.b32.xlu0 %v917, 64
    %v920 = vpop.permute.xlu0 %919
    %v922 = vmul.f32 %v904, %v920
    %924 = vrot.lane.b32.xlu0 %v856, 32
    %v925 = vpop.permute.xlu0 %924
    %v926 = vsel %vm156, %v925, 0
    %928 = vmatpush.msra.mxu0 0.0
    %929 = vmatpush.msra.mxu0 0.0
    %930 = vmatpush.msra.mxu0 0.0
    %931 = vmatpush.msra.mxu0 0.0
    %932 = vmatpush.msra.mxu0 0.0
    %933 = vmatpush.msra.mxu0 0.0
    %934 = vmatpush.msra.mxu0 0.0
    %935 = vmatpush.msra.mxu0 0.0
    %936 = vmatpush.msra.mxu0 0.0
    %937 = vmatpush.msra.mxu0 0.0
    %938 = vmatpush.msra.mxu0 0.0
    %939 = vmatpush.msra.mxu0 0.0
    %940 = vmatpush.msra.mxu0 %v35
    %941 = vmatpush.msra.mxu0 %v34
    %942 = vmatpush.msra.mxu0 %v33
    %943 = vmatpush.msra.mxu0 %v32
    %944 = vmatmul.f32.gmra.mxu0 %v926
    %v945 = vpop.f32.mrf.mxu0
    %v946 = vadd.f32 0.0, %v945
    %947 = vdwg.mxu0
    %v948 = vadd.f32 %v110, %v946
    %v949 = vxor.u32 %v948, 2147483648
    %v950 = vmul.f32 %v949, 1.442695
    %v951 = vpow.pop %v950
    %v952 = vadd.f32 %v951, 1.0
    %v953 = vrcp.pop %v952
    %v954 = vmul.f32 %v952, %v953
    %v955 = vsub.f32 1.0, %v954
    %v956 = vmul.f32 %v953, %v955
    %v957 = vadd.f32 %v953, %v956
    %vm958 = vweird.f32 %v952
    %vm959 = vweird.f32 %v953
    %vm960 = vmor %vm958, %vm959
    %v961 = vsel %vm960, %v953, %v957
    %v962 = vand.u32 2147483647, %v952
    %vm963 = vcmp.eq.f32.partialorder %v962, 8.507059e+37
    %v964 = vand.u32 %v952, 2147483648
    %v965 = vor.u32 1.1754944e-38, %v964
    %v966 = vsel %vm963, %v965, %v961
    %v967 = vmul.f32 1.0, %v966
    %v968 = vtanh.pop %v948
    %v969 = vmul.f32 %v967, %v850
    %971 = vrot.lane.b32.xlu0 %v968, 64
    %v972 = vpop.permute.xlu0 %971
    %v974 = vmul.f32 %v967, %v972
    %976 = vrot.lane.b32.xlu0 %v974, 32
    %v977 = vpop.permute.xlu0 %976
    %v979 = vadd.f32 %v969, %v977
    %v980 = vtanh.pop %v979
    %982 = vrot.lane.b32.xlu0 %v980, 64
    %v983 = vpop.permute.xlu0 %982
    %v985 = vmul.f32 %v967, %v983
    %988 = vrot.lane.b32.xlu0 %v922, 64
    %v989 = vpop.permute.xlu0 %988
    %v991 = vsel %vm156, %v925, %v989
    %v993 = vsel %vm342, %v991, 0
    %995 = vmatpush.msra.mxu0 0.0
    %996 = vmatpush.msra.mxu0 0.0
    %997 = vmatpush.msra.mxu0 0.0
    %998 = vmatpush.msra.mxu0 0.0
    %999 = vmatpush.msra.mxu0 0.0
    %1000 = vmatpush.msra.mxu0 0.0
    %1001 = vmatpush.msra.mxu0 0.0
    %1002 = vmatpush.msra.mxu0 0.0
    %1003 = vmatpush.msra.mxu0 %v120
    %1004 = vmatpush.msra.mxu0 %v119
    %1005 = vmatpush.msra.mxu0 %v118
    %1006 = vmatpush.msra.mxu0 %v117
    %1007 = vmatpush.msra.mxu0 %v116
    %1008 = vmatpush.msra.mxu0 %v115
    %1009 = vmatpush.msra.mxu0 %v114
    %1010 = vmatpush.msra.mxu0 %v113
    %1011 = vmatmul.f32.gmra.mxu0 %v993
    %v1012 = vpop.f32.mrf.mxu0
    %v1013 = vadd.f32 %v221, %v1012
    %1014 = vdwg.mxu0
    %v1015 = vxor.u32 %v1013, 2147483648
    %v1016 = vmul.f32 %v1015, 1.442695
    %v1017 = vpow.pop %v1016
    %v1018 = vadd.f32 %v1017, 1.0
    %v1019 = vrcp.pop %v1018
    %v1020 = vmul.f32 %v1018, %v1019
    %v1021 = vsub.f32 1.0, %v1020
    %v1022 = vmul.f32 %v1019, %v1021
    %v1023 = vadd.f32 %v1019, %v1022
    %vm1024 = vweird.f32 %v1018
    %vm1025 = vweird.f32 %v1019
    %vm1026 = vmor %vm1024, %vm1025
    %v1027 = vsel %vm1026, %v1019, %v1023
    %v1028 = vand.u32 2147483647, %v1018
    %vm1029 = vcmp.eq.f32.partialorder %v1028, 8.507059e+37
    %v1030 = vand.u32 %v1018, 2147483648
    %v1031 = vor.u32 1.1754944e-38, %v1030
    %v1032 = vsel %vm1029, %v1031, %v1027
    %v1033 = vmul.f32 1.0, %v1032
    %v1034 = vtanh.pop %v1013
    %v1035 = vmul.f32 %v1033, %v916
    %1037 = vrot.lane.b32.xlu0 %v1034, 64
    %v1038 = vpop.permute.xlu0 %1037
    %v1040 = vmul.f32 %v1033, %v1038
    %1042 = vrot.lane.b32.xlu0 %v1040, 32
    %v1043 = vpop.permute.xlu0 %1042
    %v1045 = vadd.f32 %v1035, %v1043
    %v1046 = vtanh.pop %v1045
    %1048 = vrot.lane.b32.xlu0 %v1046, 64
    %v1049 = vpop.permute.xlu0 %1048
    %v1051 = vmul.f32 %v1033, %v1049
    %1053 = vrot.lane.b32.xlu0 %v985, 32
    %v1054 = vpop.permute.xlu0 %1053
    %1057 = vrot.lane.b32.xlu0 %v1051, 64
    %v1058 = vpop.permute.xlu0 %1057
    %v1060 = vsel %vm156, %v1054, %v1058
    %v1062 = vsel %vm342, %v1060, 0
    %1064 = vmatpush.msra.mxu0 0.0
    %1065 = vmatpush.msra.mxu0 0.0
    %1066 = vmatpush.msra.mxu0 0.0
    %1067 = vmatpush.msra.mxu0 0.0
    %1068 = vmatpush.msra.mxu0 0.0
    %1069 = vmatpush.msra.mxu0 0.0
    %1070 = vmatpush.msra.mxu0 0.0
    %1071 = vmatpush.msra.mxu0 0.0
    %1072 = vmatpush.msra.mxu0 %v120
    %1073 = vmatpush.msra.mxu0 %v119
    %1074 = vmatpush.msra.mxu0 %v118
    %1075 = vmatpush.msra.mxu0 %v117
    %1076 = vmatpush.msra.mxu0 %v116
    %1077 = vmatpush.msra.mxu0 %v115
    %1078 = vmatpush.msra.mxu0 %v114
    %1079 = vmatpush.msra.mxu0 %v113
    %1080 = vmatmul.f32.gmra.mxu0 %v1062
    %v1081 = vpop.f32.mrf.mxu0
    %v1082 = vadd.f32 %v221, %v1081
    %1083 = vdwg.mxu0
    %v1084 = vxor.u32 %v1082, 2147483648
    %v1085 = vmul.f32 %v1084, 1.442695
    %v1086 = vpow.pop %v1085
    %v1087 = vadd.f32 %v1086, 1.0
    %v1088 = vrcp.pop %v1087
    %v1089 = vmul.f32 %v1087, %v1088
    %v1090 = vsub.f32 1.0, %v1089
    %v1091 = vmul.f32 %v1088, %v1090
    %v1092 = vadd.f32 %v1088, %v1091
    %vm1093 = vweird.f32 %v1087
    %vm1094 = vweird.f32 %v1088
    %vm1095 = vmor %vm1093, %vm1094
    %v1096 = vsel %vm1095, %v1088, %v1092
    %v1097 = vand.u32 2147483647, %v1087
    %vm1098 = vcmp.eq.f32.partialorder %v1097, 8.507059e+37
    %v1099 = vand.u32 %v1087, 2147483648
    %v1100 = vor.u32 1.1754944e-38, %v1099
    %v1101 = vsel %vm1098, %v1100, %v1096
    %v1102 = vmul.f32 1.0, %v1101
    %v1103 = vtanh.pop %v1082
    %v1104 = vmul.f32 %v1102, %v1045
    %1106 = vrot.lane.b32.xlu0 %v1103, 64
    %v1107 = vpop.permute.xlu0 %1106
    %v1109 = vmul.f32 %v1102, %v1107
    %1111 = vrot.lane.b32.xlu0 %v1109, 32
    %v1112 = vpop.permute.xlu0 %1111
    %v1114 = vadd.f32 %v1104, %v1112
    %v1115 = vtanh.pop %v1114
    %1117 = vrot.lane.b32.xlu0 %v1115, 64
    %v1118 = vpop.permute.xlu0 %1117
    %v1120 = vmul.f32 %v1102, %v1118
    %v1121 = vld [vmem:[%s2] sm:$0x1]
    %v1122 = vld [vmem:[%s2 + $0x1] sm:$0x1]
    %v1123 = vperm.slane %v1121, 0
    %1125 = vrot.lane.b32.xlu0 %v1123, 96
    %v1126 = vpop.permute.xlu0 %1125
    %v1128 = vmul.f32 %v985, %v1126
    %v1129 = vmul.f32 %v1120, %v1126
    %1132 = vrot.lane.b32.xlu0 %v1128, 32
    %v1133 = vpop.permute.xlu0 %1132
    %1134 = vrot.lane.b32.xlu0 %v1129, 32
    %v1135 = vpop.permute.xlu0 %1134
    %v1138 = vsel %vm156, %v1133, 0.0
    %1139 = vadd.xlane.f32.xlu0 %v1138
    %v1140 = vpop.xlane.xlu0 %1139
    %v1141 = vsel %vm156, %v1135, 0.0
    %1142 = vadd.xlane.f32.xlu0 %v1141
    %v1143 = vpop.xlane.xlu0 %1142
    %v1144 = vperm.slane %v1122, 0
    %v1145 = vadd.f32 %v1140, %v1144
    %v1146 = vadd.f32 %v1143, %v1144
    %vm1147 = vcmask 7168
    %1148 = vst.msk [vmem:[%s3] sm:$0xff] %vm1147, %v1145
    %1149 = vst.msk [vmem:[%s3 + $0x8] sm:$0xff] %vm1147, %v1146
    // Predicated region
    $region18: #{tpu_custom_call.1} parent=1 // pred_check
      _
    $region19: #{tpu_custom_call.1} parent=1 // pred_check_branch
      %1151 = sbr.rel (0) target = $region21
    $region20: #{tpu_custom_call.1} parent=1 // pred_region
      _
    $region21: #{tpu_custom_call.1} parent=1 // pred_fallthru
      _
    // Predicated region
    $region22: #{tpu_custom_call.1} parent=1 // pred_check
      _
    $region23: #{tpu_custom_call.1} parent=1 // pred_check_branch
      %1153 = sbr.rel (0) target = $region25
    $region24: #{tpu_custom_call.1} parent=1 // pred_region
      _
    $region25: #{tpu_custom_call.1} parent=1 // pred_fallthru
      _
    %1154 = vsyncpa [#allocation3], 1

</llo_original>
